<compile_context>
chip_gen: v7x
topology: tpu7x:2x2x1
jax: 0.10.0
libtpu: 0.0.40
codegen_flags: <defaults>
</compile_context>

<pallas_src>
import numpy as np
import jax
import jax.numpy as jnp
from jax.experimental import pallas as pl
from jax.experimental.pallas import tpu as pltpu

S = 15                                      # alphabet_size of the class input
NUM_COPIES = 1
NUM_STATES = 1 + 14 * NUM_COPIES            # 15
NUM_REDUCED = NUM_STATES - 2 * NUM_COPIES   # 13 (shared intron parameters)
NUM_CODON_STATES = 9
NUM_FREE_STATES = 1 + 5 * NUM_COPIES        # 6 states with the uniform 1/4096
NUM_IN = S + 5                              # 20 input channels

_NUC_IDX = {"A": 0, "C": 1, "G": 2, "T": 3}


def _round_up(x, m):
    return ((x + m - 1) // m) * m


# ----------------------------------------------------------------------------
# Codon-probability tables (parameter setup, plain JAX).
# Genomic-order flattening: kmer index = 16*c0 + 4*c1 + c2 with (c0, c1, c2)
# the window bases in genomic order; the in-kernel 3-mer build uses the same
# convention.
# ----------------------------------------------------------------------------
def _encode_char(c):
    if c == "N":
        return jnp.full((4,), 0.25, jnp.float32)
    return jnp.zeros((4,), jnp.float32).at[_NUC_IDX[c]].set(1.0)


def _assert_codons(codons):
    assert abs(sum(p for _, p in codons) - 1.0) < 1e-6, codons
    for triplet, prob in codons:
        assert len(triplet) == 3, codons
        assert 0.0 <= prob <= 1.0, codons


def _encode_kmer_string(triplet):
    p0, p1, p2 = (_encode_char(c) for c in triplet)
    return (p0[:, None, None] * p1[None, :, None] * p2[None, None, :]).reshape(64)


def _make_codon_probs(codons):
    _assert_codons(codons)
    return sum(p * _encode_kmer_string(t) for t, p in codons)


def build_codon_tables(start_codons, stop_codons, intron_begin_pattern,
                       intron_end_pattern):
    """Returns left_rows, right_rows of shape (9, 64) (codon-state major)."""
    any_p = _make_codon_probs([("NNN", 1.0)])
    start_p = _make_codon_probs(start_codons)
    stop_p = _make_codon_probs(stop_codons)
    ib_p = _make_codon_probs(intron_begin_pattern)
    ie_p = _make_codon_probs(intron_end_pattern)
    not_stop = any_p * (stop_p == 0).astype(jnp.float32)
    not_stop = not_stop / not_stop.sum()
    left_rows = jnp.stack(
        [any_p, start_p, ib_p, ib_p, ib_p, any_p, any_p, any_p, any_p], axis=0)
    right_rows = jnp.stack(
        [not_stop, any_p, any_p, not_stop, any_p, ie_p, ie_p, ie_p, stop_p], axis=0)
    return left_rows.astype(jnp.float32), right_rows.astype(jnp.float32)


def build_fused_codon_table(left_rows, right_rows):
    """Block-diagonal (32, 128) table.

    Rows 0..14 act on the left 3-mer (cols 0..63), rows 16..30 on the right
    3-mer (cols 64..127).  The first NUM_FREE_STATES rows of each half are
    all-ones, so the matmul yields sum(3-mer distribution) == 1 for the free
    states (no in-kernel ones-concat needed)."""
    t = jnp.zeros((32, 128), jnp.float32)
    t = t.at[0:NUM_FREE_STATES, 0:64].set(1.0)
    t = t.at[NUM_FREE_STATES:NUM_STATES, 0:64].set(left_rows)
    t = t.at[16:16 + NUM_FREE_STATES, 64:128].set(1.0)
    t = t.at[16 + NUM_FREE_STATES:16 + NUM_STATES, 64:128].set(right_rows)
    return t


# ----------------------------------------------------------------------------
# Pallas kernel: class emission (MXU), halo-based neighbour build, lane-dense
# 3-mer outer products (VPU), fused K=128 codon matmul (MXU), dense store.
# ----------------------------------------------------------------------------
def _make_kernel(length, tile_len):
    def kernel(x_ref, halo_ref, w_emit_ref, table_ref, out_ref):
        T = tile_len
        x = x_ref[0]                                             # (20, T)

        # class emission; zero-padded weight consumes all 20 channels and the
        # 1/4096 factor for the 6 free states is folded in.
        emit15 = jnp.dot(w_emit_ref[...], x,
                         preferred_element_type=jnp.float32)     # (15, T)

        # nucleotide distribution: spread 'N' uniformly over A,C,G,T.
        nuc = x[S:S + 5, :]                                      # (5, T)
        nuc4 = nuc[0:4, :] + 0.25 * nuc[4:5, :]                  # (4, T)

        # neighbours via a 2-column halo on each side of the tile.
        halo = halo_ref[0, 0]                                    # (5, 4)
        h4 = halo[0:4, :] + 0.25 * halo[4:5, :]                  # (4, 4)
        ext = jnp.concatenate([h4[:, 0:2], nuc4, h4[:, 2:4]], axis=1)   # (4, T+4)
        nm2 = ext[:, 0:T]
        nm1 = ext[:, 1:1 + T]
        np1 = ext[:, 3:3 + T]
        np2 = ext[:, 4:4 + T]

        # sequence-end fix: windows that reach past the end of this sequence
        # see the uniform 0.25 'N' distribution (also guards garbage lanes of
        # a partial last block).  Sequence starts are handled by the halo.
        end_lane = length - 1 - pl.program_id(1) * T
        lane = jax.lax.broadcasted_iota(jnp.int32, (1, T), 1)
        np1 = jnp.where(lane >= end_lane, 0.25, np1)
        np2 = jnp.where(lane >= end_lane - 1, 0.25, np2)

        # lane-dense 3-mer outer products, genomic-order flattening:
        #   left  rows 16a+4b+c = n0[a] * np1[b] * np2[c]   (window i, i+1, i+2)
        #   right rows 16a+4b+c = nm2[a]* nm1[b] * n0[c]    (window i-2, i-1, i)
        bcl = jnp.concatenate([np1[b:b + 1, :] * np2 for b in range(4)], axis=0)
        bcr = jnp.concatenate([nm1[b:b + 1, :] * nuc4 for b in range(4)], axis=0)
        combined = jnp.concatenate(
            [nuc4[a:a + 1, :] * bcl for a in range(4)]
            + [nm2[a:a + 1, :] * bcr for a in range(4)], axis=0)          # (128, T)

        # fused block-diagonal codon matmul: rows 0..14 left factor,
        # rows 16..30 right factor (free states get a factor of ~1.0).
        codon = jnp.dot(table_ref[...], combined,
                        preferred_element_type=jnp.float32)               # (32, T)

        out = emit15 * codon[0:NUM_STATES, :] * codon[16:16 + NUM_STATES, :]
        out_ref[0] = out.astype(out_ref.dtype)

    return kernel


# ----------------------------------------------------------------------------
# Wrapper glue.
# ----------------------------------------------------------------------------
def _choose_tile_len(batch, length, max_tile_len):
    tl = min(int(max_tile_len), _round_up(length, 128))
    tl = max(128, (tl // 128) * 128)
    # keep at least 2 grid steps so both v7x TensorCores get work.
    if batch * pl.cdiv(length, tl) < 2 and tl > 128:
        tl = max(128, _round_up(pl.cdiv(length, 2), 128))
    return tl


def _build_emission_matrix(emission_kernel):
    """(15, 20) emission matrix: softmax(B), shared-intron row duplication,
    folded 1/4096 for the 6 free states, zero-padded nucleotide columns."""
    bmat = jax.nn.softmax(emission_kernel[0].astype(jnp.float32), axis=-1)   # (13, S)
    b15 = jnp.concatenate([bmat[:1 + NUM_COPIES],
                           bmat[1:1 + NUM_COPIES],
                           bmat[1:1 + NUM_COPIES],
                           bmat[1 + NUM_COPIES:]], axis=0)                   # (15, S)
    scale = jnp.concatenate(
        [jnp.full((NUM_FREE_STATES, 1), 1.0 / 4096.0, jnp.float32),
         jnp.ones((NUM_CODON_STATES, 1), jnp.float32)], axis=0)
    return jnp.concatenate([b15 * scale,
                            jnp.zeros((NUM_STATES, 5), jnp.float32)], axis=1)


def _build_halo(xt, length, tile_len):
    """(batch, n_tiles, 5, 4): the 2 nuc columns before / after each tile,
    with out-of-sequence columns set to pure 'N'."""
    batch = xt.shape[0]
    n_t = pl.cdiv(length, tile_len)
    starts = np.arange(n_t) * tile_len
    cols = np.stack([starts - 2, starts - 1, starts + tile_len,
                     starts + tile_len + 1], axis=1)                    # (n_t, 4)
    valid = (cols >= 0) & (cols < length)
    cols_c = np.clip(cols, 0, length - 1).reshape(-1)
    g = jnp.take(xt, jnp.asarray(cols_c, jnp.int32), axis=2)            # (b, 20, 4*n_t)
    g = g[:, S:, :]                                                     # (b, 5, 4*n_t)
    n_fill = jnp.asarray([0.0, 0.0, 0.0, 0.0, 1.0], xt.dtype).reshape(1, 5, 1)
    g = jnp.where(jnp.asarray(valid.reshape(1, 1, -1)), g, n_fill)
    return g.reshape(batch, 5, n_t, 4).transpose(0, 2, 1, 3)            # (b, n_t, 5, 4)


def gene_pred_hmm_emitter_forward(x, emission_kernel, fused_table, *,
                                  max_tile_len=16384,
                                  vmem_limit_bytes=48 * 1024 * 1024):
    num_models, batch, length, alpha = x.shape
    assert num_models == 1   # TODO(synk): num_models > 1 not implemented.
    assert alpha == NUM_IN

    xt = jnp.transpose(x[0], (0, 2, 1))                     # (batch, 20, length)
    w_emit = _build_emission_matrix(emission_kernel).astype(x.dtype)

    tl = _choose_tile_len(batch, length, max_tile_len)
    n_t = pl.cdiv(length, tl)
    halo = _build_halo(xt, length, tl).astype(x.dtype)

    cols = batch * length
    cost = pl.CostEstimate(
        flops=int(cols * (2 * NUM_STATES * NUM_IN + 2 * 32 * 128 + 400)),
        transcendentals=0,
        bytes_accessed=int(cols * 4 * (NUM_IN + NUM_STATES)))

    out = pl.pallas_call(
        _make_kernel(length, tl),
        out_shape=jax.ShapeDtypeStruct((batch, NUM_STATES, length), x.dtype),
        grid=(batch, n_t),
        in_specs=[
            pl.BlockSpec((1, NUM_IN, tl), lambda b, t: (b, 0, t)),
            pl.BlockSpec((1, 1, 5, 4), lambda b, t: (b, t, 0, 0)),
            pl.BlockSpec((NUM_STATES, NUM_IN), lambda b, t: (0, 0)),
            pl.BlockSpec((32, 128), lambda b, t: (0, 0)),
        ],
        out_specs=pl.BlockSpec((1, NUM_STATES, tl), lambda b, t: (b, 0, t)),
        compiler_params=pltpu.CompilerParams(
            dimension_semantics=("parallel", "parallel"),
            vmem_limit_bytes=vmem_limit_bytes),
        cost_estimate=cost,
    )(xt, halo, w_emit, fused_table)

    return jnp.transpose(out, (0, 2, 1))[None]              # (1, batch, length, 15)


# ----------------------------------------------------------------------------
# Pure-JAX reference of the module math (layout independent, f32 exact dots).
# ----------------------------------------------------------------------------
def _reference(x, emission_kernel, left_rows, right_rows):
    HI = jax.lax.Precision.HIGHEST
    num_models, batch, length, _ = x.shape
    class_in = x[..., :S]
    bmat = jax.nn.softmax(emission_kernel, axis=-1)                  # (k, 13, S)
    emit = jnp.einsum('kbls,kqs->kblq', class_in, bmat, precision=HI)
    emit = jnp.concatenate([emit[..., :1 + NUM_COPIES],
                            emit[..., 1:1 + NUM_COPIES],
                            emit[..., 1:1 + NUM_COPIES],
                            emit[..., 1 + NUM_COPIES:]], axis=-1)    # (k,b,l,15)

    nuc = x[..., S:]
    nuc4 = nuc[..., :4] + nuc[..., 4:5] * 0.25
    pad = jnp.full((num_models, batch, 1, 4), 0.25, x.dtype)
    np1 = jnp.concatenate([nuc4[:, :, 1:], pad], axis=2)
    np2 = jnp.concatenate([nuc4[:, :, 2:], pad, pad], axis=2)
    nm1 = jnp.concatenate([pad, nuc4[:, :, :-1]], axis=2)
    nm2 = jnp.concatenate([pad, pad, nuc4[:, :, :-2]], axis=2)
    left64 = (nuc4[..., :, None, None] * np1[..., None, :, None]
              * np2[..., None, None, :]).reshape(num_models, batch, length, 64)
    right64 = (nm2[..., :, None, None] * nm1[..., None, :, None]
               * nuc4[..., None, None, :]).reshape(num_models, batch, length, 64)
    lemit = jnp.einsum('kblm,qm->kblq', left64, left_rows, precision=HI)
    remit = jnp.einsum('kblm,qm->kblq', right64, right_rows, precision=HI)
    codon9 = lemit * remit
    codon15 = jnp.concatenate(
        [jnp.full(codon9.shape[:-1] + (NUM_FREE_STATES,), 1.0 / 4096.0, x.dtype),
         codon9], axis=-1)
    return emit * codon15


if __name__ == "__main__":
    key = jax.random.PRNGKey(0)
    k1, k2, k3, k4, k5 = jax.random.split(key, 5)

    start_codons = [("ATG", 1.0)]
    stop_codons = [("TAA", 0.34), ("TAG", 0.33), ("TGA", 0.33)]
    intron_begin_pattern = [("NGT", 0.99), ("NGC", 0.005), ("NAT", 0.005)]
    intron_end_pattern = [("AGN", 1.0)]
    left_rows, right_rows = build_codon_tables(
        start_codons, stop_codons, intron_begin_pattern, intron_end_pattern)
    fused_table = build_fused_codon_table(left_rows, right_rows)

    def run_case(kc, kn, ke, batch, length, max_tile_len):
        class_probs = jax.nn.softmax(
            jax.random.normal(kc, (1, batch, length, S)), axis=-1)
        nuc_probs = jax.nn.softmax(
            jax.random.normal(kn, (1, batch, length, 5)), axis=-1)
        x = jnp.concatenate([class_probs, nuc_probs], axis=-1).astype(jnp.float32)
        emission_kernel = 0.1 * jax.random.normal(
            ke, (1, NUM_REDUCED, S), dtype=jnp.float32)

        out = gene_pred_hmm_emitter_forward(
            x, emission_kernel, fused_table, max_tile_len=max_tile_len)
        out = jax.block_until_ready(out)
        ref = jax.block_until_ready(
            _reference(x, emission_kernel, left_rows, right_rows))

        assert out.shape == (1, batch, length, NUM_STATES), out.shape
        # tolerance absorbs the MXU's default (bf16-pass) matmul precision
        # relative to the f32-exact reference contractions.
        ok = bool(jnp.all(jnp.abs(out - ref) <= 1e-7 + 0.05 * jnp.abs(ref)))
        assert ok, "kernel/reference mismatch"

    # tiled path: full + partial blocks, halos crossing tile boundaries.
    run_case(k1, k2, k3, batch=2, length=896, max_tile_len=256)
    # single sequence, odd length, partial last block.
    run_case(k4, k5, k3, batch=1, length=300, max_tile_len=128)

    print("KERNEL_OK")
</pallas_src>

<mosaic_0001>
module attributes {stable_mosaic.version = 11 : i64} {
  func.func @kernel(%arg0: i32, %arg1: i32, %arg2: memref<1x20x256xf32, #tpu.memory_space<vmem>>, %arg3: memref<1x1x5x4xf32, #tpu.memory_space<vmem>>, %arg4: memref<15x20xf32, #tpu.memory_space<vmem>>, %arg5: memref<32x128xf32, #tpu.memory_space<vmem>>, %arg6: memref<1x15x256xf32, #tpu.memory_space<vmem>>) attributes {dimension_semantics = [#tpu.dimension_semantics<parallel>, #tpu.dimension_semantics<parallel>], iteration_bounds = array<i64: 2, 4>, scalar_prefetch = 0 : i64, scratch_operands = 0 : i64, tpu.core_type = #tpu.core_type<tc>, window_params = [{transform_indices = @transform_0, window_bounds = array<i64: 1, 20, 256>}, {transform_indices = @transform_1, window_bounds = array<i64: 1, 1, 5, 4>}, {pipeline_mode = #tpu.pipeline_mode<synchronous>, transform_indices = @transform_2, window_bounds = array<i64: 15, 20>}, {pipeline_mode = #tpu.pipeline_mode<synchronous>, transform_indices = @transform_3, window_bounds = array<i64: 32, 128>}, {transform_indices = @transform_4, window_bounds = array<i64: 1, 15, 256>}]} {
    %c0 = arith.constant 0 : index
    %c0_0 = arith.constant 0 : index
    %c0_1 = arith.constant 0 : index
    %0 = vector.load %arg2[%c0, %c0_0, %c0_1] : memref<1x20x256xf32, #tpu.memory_space<vmem>>, vector<1x20x256xf32>
    %1 = vector.shape_cast %0 : vector<1x20x256xf32> to vector<20x256xf32>
    %c0_2 = arith.constant 0 : index
    %c0_3 = arith.constant 0 : index
    %2 = vector.load %arg4[%c0_2, %c0_3] : memref<15x20xf32, #tpu.memory_space<vmem>>, vector<15x20xf32>
    %cst = arith.constant dense<0.000000e+00> : vector<15x256xf32>
    %3 = tpu.matmul %2, %1, %cst {dimension_numbers = #tpu.dot_dimension_numbers<[1], [0], [0], [1], [0, 0, 1, 1], [], []>} : vector<15x20xf32>, vector<20x256xf32>, vector<15x256xf32> -> vector<15x256xf32>
    %4 = vector.extract_strided_slice %1 {offsets = [15, 0], sizes = [5, 256], strides = [1, 1]} : vector<20x256xf32> to vector<5x256xf32>
    %5 = vector.extract_strided_slice %4 {offsets = [0, 0], sizes = [4, 256], strides = [1, 1]} : vector<5x256xf32> to vector<4x256xf32>
    %6 = vector.extract_strided_slice %4 {offsets = [4, 0], sizes = [1, 256], strides = [1, 1]} : vector<5x256xf32> to vector<1x256xf32>
    %cst_4 = arith.constant 2.500000e-01 : f32
    %7 = vector.broadcast %cst_4 : f32 to vector<1x256xf32>
    %8 = arith.mulf %7, %6 : vector<1x256xf32>
    %9 = vector.broadcast %8 : vector<1x256xf32> to vector<4x256xf32>
    %10 = arith.addf %5, %9 : vector<4x256xf32>
    %c0_5 = arith.constant 0 : index
    %c0_6 = arith.constant 0 : index
    %c0_7 = arith.constant 0 : index
    %c0_8 = arith.constant 0 : index
    %11 = vector.load %arg3[%c0_5, %c0_6, %c0_7, %c0_8] : memref<1x1x5x4xf32, #tpu.memory_space<vmem>>, vector<1x1x5x4xf32>
    %12 = vector.shape_cast %11 : vector<1x1x5x4xf32> to vector<5x4xf32>
    %13 = vector.extract_strided_slice %12 {offsets = [0, 0], sizes = [4, 4], strides = [1, 1]} : vector<5x4xf32> to vector<4x4xf32>
    %14 = vector.extract_strided_slice %12 {offsets = [4, 0], sizes = [1, 4], strides = [1, 1]} : vector<5x4xf32> to vector<1x4xf32>
    %cst_9 = arith.constant 2.500000e-01 : f32
    %15 = vector.broadcast %cst_9 : f32 to vector<1x4xf32>
    %16 = arith.mulf %15, %14 : vector<1x4xf32>
    %17 = vector.broadcast %16 : vector<1x4xf32> to vector<4x4xf32>
    %18 = arith.addf %13, %17 : vector<4x4xf32>
    %19 = vector.extract_strided_slice %18 {offsets = [0, 0], sizes = [4, 2], strides = [1, 1]} : vector<4x4xf32> to vector<4x2xf32>
    %20 = vector.extract_strided_slice %18 {offsets = [0, 2], sizes = [4, 2], strides = [1, 1]} : vector<4x4xf32> to vector<4x2xf32>
    %21 = tpu.concatenate %19, %10, %20 in 1 : vector<4x2xf32>, vector<4x256xf32>, vector<4x2xf32> -> vector<4x260xf32>
    %22 = vector.extract_strided_slice %21 {offsets = [0, 0], sizes = [4, 256], strides = [1, 1]} : vector<4x260xf32> to vector<4x256xf32>
    %23 = vector.extract_strided_slice %21 {offsets = [0, 1], sizes = [4, 256], strides = [1, 1]} : vector<4x260xf32> to vector<4x256xf32>
    %24 = vector.extract_strided_slice %21 {offsets = [0, 3], sizes = [4, 256], strides = [1, 1]} : vector<4x260xf32> to vector<4x256xf32>
    %25 = vector.extract_strided_slice %21 {offsets = [0, 4], sizes = [4, 256], strides = [1, 1]} : vector<4x260xf32> to vector<4x256xf32>
    %c256_i32 = arith.constant 256 : i32
    %26 = arith.muli %arg1, %c256_i32 : i32
    %c895_i32 = arith.constant 895 : i32
    %27 = arith.subi %c895_i32, %26 : i32
    %28 = tpu.iota {dimensions = array<i32: 1>} : vector<1x256xi32>
    %29 = vector.broadcast %27 : i32 to vector<1x256xi32>
    %30 = arith.cmpi sge, %28, %29 : vector<1x256xi32>
    %cst_10 = arith.constant 2.500000e-01 : f32
    %31 = vector.shape_cast %30 : vector<1x256xi1> to vector<1x256xi1>
    %32 = vector.broadcast %31 : vector<1x256xi1> to vector<4x256xi1>
    %33 = vector.broadcast %cst_10 : f32 to vector<4x256xf32>
    %34 = arith.select %32, %33, %24 : vector<4x256xi1>, vector<4x256xf32>
    %c1_i32 = arith.constant 1 : i32
    %35 = arith.subi %27, %c1_i32 : i32
    %36 = vector.broadcast %35 : i32 to vector<1x256xi32>
    %37 = arith.cmpi sge, %28, %36 : vector<1x256xi32>
    %cst_11 = arith.constant 2.500000e-01 : f32
    %38 = vector.shape_cast %37 : vector<1x256xi1> to vector<1x256xi1>
    %39 = vector.broadcast %38 : vector<1x256xi1> to vector<4x256xi1>
    %40 = vector.broadcast %cst_11 : f32 to vector<4x256xf32>
    %41 = arith.select %39, %40, %25 : vector<4x256xi1>, vector<4x256xf32>
    %42 = vector.extract_strided_slice %34 {offsets = [0, 0], sizes = [1, 256], strides = [1, 1]} : vector<4x256xf32> to vector<1x256xf32>
    %43 = vector.broadcast %42 : vector<1x256xf32> to vector<4x256xf32>
    %44 = arith.mulf %43, %41 : vector<4x256xf32>
    %45 = vector.extract_strided_slice %34 {offsets = [1, 0], sizes = [1, 256], strides = [1, 1]} : vector<4x256xf32> to vector<1x256xf32>
    %46 = vector.broadcast %45 : vector<1x256xf32> to vector<4x256xf32>
    %47 = arith.mulf %46, %41 : vector<4x256xf32>
    %48 = vector.extract_strided_slice %34 {offsets = [2, 0], sizes = [1, 256], strides = [1, 1]} : vector<4x256xf32> to vector<1x256xf32>
    %49 = vector.broadcast %48 : vector<1x256xf32> to vector<4x256xf32>
    %50 = arith.mulf %49, %41 : vector<4x256xf32>
    %51 = vector.extract_strided_slice %34 {offsets = [3, 0], sizes = [1, 256], strides = [1, 1]} : vector<4x256xf32> to vector<1x256xf32>
    %52 = vector.broadcast %51 : vector<1x256xf32> to vector<4x256xf32>
    %53 = arith.mulf %52, %41 : vector<4x256xf32>
    %54 = tpu.concatenate %44, %47, %50, %53 in 0 : vector<4x256xf32>, vector<4x256xf32>, vector<4x256xf32>, vector<4x256xf32> -> vector<16x256xf32>
    %55 = vector.extract_strided_slice %23 {offsets = [0, 0], sizes = [1, 256], strides = [1, 1]} : vector<4x256xf32> to vector<1x256xf32>
    %56 = vector.broadcast %55 : vector<1x256xf32> to vector<4x256xf32>
    %57 = arith.mulf %56, %10 : vector<4x256xf32>
    %58 = vector.extract_strided_slice %23 {offsets = [1, 0], sizes = [1, 256], strides = [1, 1]} : vector<4x256xf32> to vector<1x256xf32>
    %59 = vector.broadcast %58 : vector<1x256xf32> to vector<4x256xf32>
    %60 = arith.mulf %59, %10 : vector<4x256xf32>
    %61 = vector.extract_strided_slice %23 {offsets = [2, 0], sizes = [1, 256], strides = [1, 1]} : vector<4x256xf32> to vector<1x256xf32>
    %62 = vector.broadcast %61 : vector<1x256xf32> to vector<4x256xf32>
    %63 = arith.mulf %62, %10 : vector<4x256xf32>
    %64 = vector.extract_strided_slice %23 {offsets = [3, 0], sizes = [1, 256], strides = [1, 1]} : vector<4x256xf32> to vector<1x256xf32>
    %65 = vector.broadcast %64 : vector<1x256xf32> to vector<4x256xf32>
    %66 = arith.mulf %65, %10 : vector<4x256xf32>
    %67 = tpu.concatenate %57, %60, %63, %66 in 0 : vector<4x256xf32>, vector<4x256xf32>, vector<4x256xf32>, vector<4x256xf32> -> vector<16x256xf32>
    %68 = vector.extract_strided_slice %10 {offsets = [0, 0], sizes = [1, 256], strides = [1, 1]} : vector<4x256xf32> to vector<1x256xf32>
    %69 = vector.broadcast %68 : vector<1x256xf32> to vector<16x256xf32>
    %70 = arith.mulf %69, %54 : vector<16x256xf32>
    %71 = vector.extract_strided_slice %10 {offsets = [1, 0], sizes = [1, 256], strides = [1, 1]} : vector<4x256xf32> to vector<1x256xf32>
    %72 = vector.broadcast %71 : vector<1x256xf32> to vector<16x256xf32>
    %73 = arith.mulf %72, %54 : vector<16x256xf32>
    %74 = vector.extract_strided_slice %10 {offsets = [2, 0], sizes = [1, 256], strides = [1, 1]} : vector<4x256xf32> to vector<1x256xf32>
    %75 = vector.broadcast %74 : vector<1x256xf32> to vector<16x256xf32>
    %76 = arith.mulf %75, %54 : vector<16x256xf32>
    %77 = vector.extract_strided_slice %10 {offsets = [3, 0], sizes = [1, 256], strides = [1, 1]} : vector<4x256xf32> to vector<1x256xf32>
    %78 = vector.broadcast %77 : vector<1x256xf32> to vector<16x256xf32>
    %79 = arith.mulf %78, %54 : vector<16x256xf32>
    %80 = vector.extract_strided_slice %22 {offsets = [0, 0], sizes = [1, 256], strides = [1, 1]} : vector<4x256xf32> to vector<1x256xf32>
    %81 = vector.broadcast %80 : vector<1x256xf32> to vector<16x256xf32>
    %82 = arith.mulf %81, %67 : vector<16x256xf32>
    %83 = vector.extract_strided_slice %22 {offsets = [1, 0], sizes = [1, 256], strides = [1, 1]} : vector<4x256xf32> to vector<1x256xf32>
    %84 = vector.broadcast %83 : vector<1x256xf32> to vector<16x256xf32>
    %85 = arith.mulf %84, %67 : vector<16x256xf32>
    %86 = vector.extract_strided_slice %22 {offsets = [2, 0], sizes = [1, 256], strides = [1, 1]} : vector<4x256xf32> to vector<1x256xf32>
    %87 = vector.broadcast %86 : vector<1x256xf32> to vector<16x256xf32>
    %88 = arith.mulf %87, %67 : vector<16x256xf32>
    %89 = vector.extract_strided_slice %22 {offsets = [3, 0], sizes = [1, 256], strides = [1, 1]} : vector<4x256xf32> to vector<1x256xf32>
    %90 = vector.broadcast %89 : vector<1x256xf32> to vector<16x256xf32>
    %91 = arith.mulf %90, %67 : vector<16x256xf32>
    %92 = tpu.concatenate %70, %73, %76, %79, %82, %85, %88, %91 in 0 : vector<16x256xf32>, vector<16x256xf32>, vector<16x256xf32>, vector<16x256xf32>, vector<16x256xf32>, vector<16x256xf32>, vector<16x256xf32>, vector<16x256xf32> -> vector<128x256xf32>
    %c0_12 = arith.constant 0 : index
    %c0_13 = arith.constant 0 : index
    %93 = vector.load %arg5[%c0_12, %c0_13] : memref<32x128xf32, #tpu.memory_space<vmem>>, vector<32x128xf32>
    %cst_14 = arith.constant dense<0.000000e+00> : vector<32x256xf32>
    %94 = tpu.matmul %93, %92, %cst_14 {dimension_numbers = #tpu.dot_dimension_numbers<[1], [0], [0], [1], [0, 0, 1, 1], [], []>} : vector<32x128xf32>, vector<128x256xf32>, vector<32x256xf32> -> vector<32x256xf32>
    %95 = vector.extract_strided_slice %94 {offsets = [0, 0], sizes = [15, 256], strides = [1, 1]} : vector<32x256xf32> to vector<15x256xf32>
    %96 = arith.mulf %3, %95 : vector<15x256xf32>
    %97 = vector.extract_strided_slice %94 {offsets = [16, 0], sizes = [15, 256], strides = [1, 1]} : vector<32x256xf32> to vector<15x256xf32>
    %98 = arith.mulf %96, %97 : vector<15x256xf32>
    %c0_15 = arith.constant 0 : index
    %c0_16 = arith.constant 0 : index
    %c0_17 = arith.constant 0 : index
    %99 = vector.load %arg6[%c0_15, %c0_16, %c0_17] : memref<1x15x256xf32, #tpu.memory_space<vmem>>, vector<1x15x256xf32>
    %100 = vector.shape_cast %99 : vector<1x15x256xf32> to vector<15x256xf32>
    %101 = vector.shape_cast %98 : vector<15x256xf32> to vector<1x15x256xf32>
    tpu.vector_store %arg6[%c0_15, %c0_16, %c0_17], %101 {strides = array<i32>} : memref<1x15x256xf32, #tpu.memory_space<vmem>>, vector<1x15x256xf32>,
    return
  }
  func.func @transform_0(%arg0: i32, %arg1: i32) -> (i32, i32, i32) {
    %c0_i32 = arith.constant 0 : i32
    %c0_i32_0 = arith.constant 0 : i32
    return %arg0, %c0_i32, %arg1 : i32, i32, i32
  }
  func.func @transform_1(%arg0: i32, %arg1: i32) -> (i32, i32, i32, i32) {
    %c0_i32 = arith.constant 0 : i32
    %c0_i32_0 = arith.constant 0 : i32
    %c0_i32_1 = arith.constant 0 : i32
    return %arg0, %arg1, %c0_i32, %c0_i32_0 : i32, i32, i32, i32
  }
  func.func @transform_2(%arg0: i32, %arg1: i32) -> (i32, i32) {
    %c0_i32 = arith.constant 0 : i32
    %c0_i32_0 = arith.constant 0 : i32
    %c0_i32_1 = arith.constant 0 : i32
    return %c0_i32, %c0_i32_0 : i32, i32
  }
  func.func @transform_3(%arg0: i32, %arg1: i32) -> (i32, i32) {
    %c0_i32 = arith.constant 0 : i32
    %c0_i32_0 = arith.constant 0 : i32
    %c0_i32_1 = arith.constant 0 : i32
    return %c0_i32, %c0_i32_0 : i32, i32
  }
  func.func @transform_4(%arg0: i32, %arg1: i32) -> (i32, i32, i32) {
    %c0_i32 = arith.constant 0 : i32
    %c0_i32_0 = arith.constant 0 : i32
    return %arg0, %c0_i32, %arg1 : i32, i32, i32
  }
}

</mosaic_0001>

<llo_original>
// kernel: tpu_custom_call.1
$region0: #{tpu_custom_call.1}
  #allocation0 [shape = 'u32[]', space=smem, size = 0x4, offset = 0x4, fixed_abs, tag = 'smem constant byte address 0x4 - core index']
  #allocation1 [shape = 'u32[144,128]{1,0:T(1,128)}', space=vmem, size = 0x12000, scoped, tag = 'internal scratch']
  %s0 = inlined_call_operand.vmem [shape: f32[2,20,896], index: 0, kind: input, shape index: {}]
  %s1 = inlined_call_operand.vmem [shape: f32[2,4,5,4], index: 1, kind: input, shape index: {}]
  %s2 = inlined_call_operand.vmem [shape: f32[15,20], index: 2, kind: input, shape index: {}]
  %s3 = inlined_call_operand.vmem [shape: f32[32,128], index: 3, kind: input, shape index: {}]
  %s4 = inlined_call_operand.vmem [shape: f32[2,15,896], index: 4, kind: output, shape index: {}]
  %s5 = sld [smem:[#allocation0]]
  $region177: #{tpu_custom_call.1} parent=0
    _
  %s7 = ssub.s32 1, %s5
  %s8 = scalar_select 0, %s7, %s5
  $region1: #{tpu_custom_call.1} parent=0
    #allocation2 [shape = 'u8[49152]{0}', space=vmem, size = 0xc000, scoped, tag = 'input window, operand 0']
    #allocation3 [shape = 'u8[32768]{0}', space=vmem, size = 0x8000, scoped, tag = 'output window, operand 0']
    loop: start=0, step=1, limit=10
    $region2: #{tpu_custom_call.1} parent=1 // loop_pre_header
      _
    $region3: #{tpu_custom_call.1} parent=1 // loop_header
      %s10 = sphi 0, %s14
      %p11 = scmp.ge.s32.totalorder %s10, 10
      %s17 = sphi 0, %s29
      %s18 = sphi 0, %s25
      %s19 = sphi 0, %s17
      %s20 = sphi 0, %s18
      %s21 = sphi 0, %s19
      %s22 = sphi 0, %s20
      %s34 = sphi 0, %s36
      %s37 = sphi 0, %s34
      %s38 = sphi 0, %s37
      %s54 = sphi 0, %s38
      %s62 = sphi 0, %s64
      %s65 = sphi 0, %s62
      %s66 = sphi 0, %s65
      %s82 = sphi 0, %s66
      %s86 = sphi 0, %s86
      %s88 = sphi 0, %s86
      %s89 = sphi 0, %s88
      %s103 = sphi 0, %s89
      %s107 = sphi 0, %s107
      %s109 = sphi 0, %s107
      %s110 = sphi 0, %s109
      %s124 = sphi 0, %s110
      %s132 = sphi 0, %s134
      %s135 = sphi 0, %s132
      %s136 = sphi 0, %s135
      %s152 = sphi 0, %s136
    $region4: #{tpu_custom_call.1} parent=1 // loop_header_branch
      %13 = sbr.rel (%p11) target = $region8
    $region5: #{tpu_custom_call.1} parent=1 // loop_body
      %s15 = ssub.s32 %s10, 1
      %s16 = ssub.s32 %s10, 2
      %s23 = sadd.s32 1, %s18
      %p24 = scmp.ge.s32.totalorder %s23, 4
      %s25 = scalar_select %p24, 0, %s23
      %s26 = sadd.s32 1, %s17
      %s27 = scalar_select %p24, %s26, %s17
      %p28 = scmp.ge.s32.totalorder %s27, 2
      %s29 = scalar_select %p28, 0, %s27
      %s30 = ssub.s32 %s17, %s29
      %s31 = ssub.s32 %s18, %s25
      %s32 = sor.u32 %s30, %s31
      %p33 = scmp.eq.s32.totalorder %s32, 0
      %s35 = sadd.s32 %s34, 1
      %s36 = scalar_select %p33, %s34, %s35
      %p39 = pneg %p33
      %p40 = scmp.eq.s32.totalorder %s10, 7
      %p41 = por %p39, %p40
      %p42 = scmp.ne.s32.totalorder %s34, %s37
      %p43 = scmp.eq.s32.totalorder %s10, 0
      %p44 = por %p42, %p43
      %p45 = scmp.ne.s32.totalorder %s34, %s37
      %p46 = scmp.eq.s32.totalorder %s15, 7
      %p47 = por %p45, %p46
      %p48 = scmp.ne.s32.totalorder %s37, %s38
      %p49 = scmp.eq.s32.totalorder %s15, 0
      %p50 = por %p48, %p49
      %p51 = scmp.ne.s32.totalorder %s37, %s38
      %p52 = scmp.eq.s32.totalorder %s16, 7
      %p53 = por %p51, %p52
      %p55 = scmp.ne.s32.totalorder %s38, %s54
      %p56 = scmp.eq.s32.totalorder %s16, 0
      %p57 = por %p55, %p56
      %s58 = ssub.s32 %s17, %s29
      %s59 = ssub.s32 %s18, %s25
      %s60 = sor.u32 %s58, %s59
      %p61 = scmp.eq.s32.totalorder %s60, 0
      %s63 = sadd.s32 %s62, 1
      %s64 = scalar_select %p61, %s62, %s63
      %p67 = pneg %p61
      %p68 = scmp.eq.s32.totalorder %s10, 7
      %p69 = por %p67, %p68
      %p70 = scmp.ne.s32.totalorder %s62, %s65
      %p71 = scmp.eq.s32.totalorder %s10, 0
      %p72 = por %p70, %p71
      %p73 = scmp.ne.s32.totalorder %s62, %s65
      %p74 = scmp.eq.s32.totalorder %s15, 7
      %p75 = por %p73, %p74
      %p76 = scmp.ne.s32.totalorder %s65, %s66
      %p77 = scmp.eq.s32.totalorder %s15, 0
      %p78 = por %p76, %p77
      %p79 = scmp.ne.s32.totalorder %s65, %s66
      %p80 = scmp.eq.s32.totalorder %s16, 7
      %p81 = por %p79, %p80
      %p83 = scmp.ne.s32.totalorder %s66, %s82
      %p84 = scmp.eq.s32.totalorder %s16, 0
      %p85 = por %p83, %p84
      %s87 = sadd.s32 %s86, 1
      %p90 = scmp.eq.s32.totalorder %s10, 7
      %p91 = scmp.ne.s32.totalorder %s86, %s88
      %p92 = scmp.eq.s32.totalorder %s10, 0
      %p93 = por %p91, %p92
      %p94 = scmp.ne.s32.totalorder %s86, %s88
      %p95 = scmp.eq.s32.totalorder %s15, 7
      %p96 = por %p94, %p95
      %p97 = scmp.ne.s32.totalorder %s88, %s89
      %p98 = scmp.eq.s32.totalorder %s15, 0
      %p99 = por %p97, %p98
      %p100 = scmp.ne.s32.totalorder %s88, %s89
      %p101 = scmp.eq.s32.totalorder %s16, 7
      %p102 = por %p100, %p101
      %p104 = scmp.ne.s32.totalorder %s89, %s103
      %p105 = scmp.eq.s32.totalorder %s16, 0
      %p106 = por %p104, %p105
      %s108 = sadd.s32 %s107, 1
      %p111 = scmp.eq.s32.totalorder %s10, 7
      %p112 = scmp.ne.s32.totalorder %s107, %s109
      %p113 = scmp.eq.s32.totalorder %s10, 0
      %p114 = por %p112, %p113
      %p115 = scmp.ne.s32.totalorder %s107, %s109
      %p116 = scmp.eq.s32.totalorder %s15, 7
      %p117 = por %p115, %p116
      %p118 = scmp.ne.s32.totalorder %s109, %s110
      %p119 = scmp.eq.s32.totalorder %s15, 0
      %p120 = por %p118, %p119
      %p121 = scmp.ne.s32.totalorder %s109, %s110
      %p122 = scmp.eq.s32.totalorder %s16, 7
      %p123 = por %p121, %p122
      %p125 = scmp.ne.s32.totalorder %s110, %s124
      %p126 = scmp.eq.s32.totalorder %s16, 0
      %p127 = por %p125, %p126
      %s128 = ssub.s32 %s17, %s29
      %s129 = ssub.s32 %s18, %s25
      %s130 = sor.u32 %s128, %s129
      %p131 = scmp.eq.s32.totalorder %s130, 0
      %s133 = sadd.s32 %s132, 1
      %s134 = scalar_select %p131, %s132, %s133
      %p137 = pneg %p131
      %p138 = scmp.eq.s32.totalorder %s10, 7
      %p139 = por %p137, %p138
      %p140 = scmp.ne.s32.totalorder %s132, %s135
      %p141 = scmp.eq.s32.totalorder %s10, 0
      %p142 = por %p140, %p141
      %p143 = scmp.ne.s32.totalorder %s132, %s135
      %p144 = scmp.eq.s32.totalorder %s15, 7
      %p145 = por %p143, %p144
      %p146 = scmp.ne.s32.totalorder %s135, %s136
      %p147 = scmp.eq.s32.totalorder %s15, 0
      %p148 = por %p146, %p147
      %p149 = scmp.ne.s32.totalorder %s135, %s136
      %p150 = scmp.eq.s32.totalorder %s16, 7
      %p151 = por %p149, %p150
      %p153 = scmp.ne.s32.totalorder %s136, %s152
      %p154 = scmp.eq.s32.totalorder %s16, 0
      %p155 = por %p153, %p154
      %p156 = scmp.le.s32.totalorder 1, %s10
      %p157 = scmp.lt.s32.totalorder %s10, 9
      %p158 = pnand %p156, %p157
      %p159 = pneg %p158
      // Predicated region
      $region9: #{tpu_custom_call.1} parent=5 // pred_check
        _
      $region10: #{tpu_custom_call.1} parent=5 // pred_check_branch
        %161 = sbr.rel (%p158) target = $region12
      $region11: #{tpu_custom_call.1} parent=5 // pred_region
        %s162 = ssub.s32 %s10, 1
        // Predicated region
        $region13: #{tpu_custom_call.1} parent=11 // pred_check
          %p163 = pneg %p99
        $region14: #{tpu_custom_call.1} parent=11 // pred_check_branch
          %165 = sbr.rel (%p163) target = $region16
        $region15: #{tpu_custom_call.1} parent=11 // pred_region
          _
        $region16: #{tpu_custom_call.1} parent=11 // pred_fallthru
          _
        // Predicated region
        $region17: #{tpu_custom_call.1} parent=11 // pred_check
          %p166 = pneg %p120
        $region18: #{tpu_custom_call.1} parent=11 // pred_check_branch
          %168 = sbr.rel (%p166) target = $region20
        $region19: #{tpu_custom_call.1} parent=11 // pred_region
          _
        $region20: #{tpu_custom_call.1} parent=11 // pred_fallthru
          _
      $region12: #{tpu_custom_call.1} parent=5 // pred_fallthru
        _
      %p169 = scmp.lt.s32.totalorder %s10, 8
      // Predicated region
      $region21: #{tpu_custom_call.1} parent=5 // pred_check
        %p170 = pneg %p169
      $region22: #{tpu_custom_call.1} parent=5 // pred_check_branch
        %172 = sbr.rel (%p170) target = $region24
      $region23: #{tpu_custom_call.1} parent=5 // pred_region
        // Predicated region
        $region25: #{tpu_custom_call.1} parent=23 // pred_check
          %p173 = pneg %p44
        $region26: #{tpu_custom_call.1} parent=23 // pred_check_branch
          %175 = sbr.rel (%p173) target = $region28
        $region27: #{tpu_custom_call.1} parent=23 // pred_region
          %s176 = sand.u32 %s34, 1
          %s177 = sand.u32 %s34, 1
          %s178 = smul.addr %s177, 48
          %s179 = scalar_lea.vmem [#allocation2], %s178
          %s180 = smul.u32 2, %s18
          %s181 = ssub.s32 7, %s180
          %p182 = scmp.lt.s32.totalorder %s181, 2
          %s183 = scalar_select %p182, %s181, 2
          %s184 = smul.u32 384, %s183
          %p185 = scmp.ne.s32.totalorder 0, %s184
          %s186 = smul.addr %s17, 21
          %s187 = sadd.s32 %s180, %s186
          %s188 = smul.addr %s187, 8
          %s189 = scalar_lea.vmem %s0, %s188
          %s190 = smul.u32 %s183, 8
          // Predicated region
          $region29: #{tpu_custom_call.1} parent=27 // pred_check
            %p191 = pneg %p185
          $region30: #{tpu_custom_call.1} parent=27 // pred_check_branch
            %193 = sbr.rel (%p191) target = $region32
          $region31: #{tpu_custom_call.1} parent=27 // pred_region
            %p194 = scmp.lt.u32.totalorder %s190, 8
            %p195 = pneg %p194
            // Predicated region
            $region33: #{tpu_custom_call.1} parent=31 // pred_check
              _
            $region34: #{tpu_custom_call.1} parent=31 // pred_check_branch
              %197 = sbr.rel (%p194) target = $region36
            $region35: #{tpu_custom_call.1} parent=31 // pred_region
              %s216 = sand.u32 %s190, 7
              %p217 = scmp.eq.s32.totalorder %s216, 0
              // Predicated region
              $region48: #{tpu_custom_call.1} parent=35 // pred_check
                %p218 = pneg %p217
              $region49: #{tpu_custom_call.1} parent=35 // pred_check_branch
                %220 = sbr.rel (%p218) target = $region51
              $region50: #{tpu_custom_call.1} parent=35 // pred_region
                %s221 = sshrl.u32 %s190, 3
                %s222 = sdiv.u32.pop %s221, 24
                %s223 = srem.u32.pop %s221, 24
                // While loop
                $region52: #{tpu_custom_call.1} parent=50 // loop_pre_header
                  _
                $region53: #{tpu_custom_call.1} parent=50 // loop_header
                  %s227 = sphi 0, %s229
                  %p228 = scmp.ge.s32.totalorder %s227, %s222
                  %s232 = sphi 0, %s381
                  %s233 = sphi %s189, %s384
                  %s234 = sphi %s179, %s385
                $region54: #{tpu_custom_call.1} parent=50 // loop_header_branch
                  %231 = sbr.rel (%p228) target = $region58
                $region55: #{tpu_custom_call.1} parent=50 // loop_body
                  %v235 = vld [vmem:[%s233] sm:$0xff]
                  %236 = vst [vmem:[%s234] sm:$0xff] %v235
                  %v237 = vld [vmem:[%s233 + $0x8] sm:$0xff]
                  %238 = vst [vmem:[%s234 + $0x8] sm:$0xff] %v237
                  %v239 = vld [vmem:[%s233 + $0x10] sm:$0xff]
                  %240 = vst [vmem:[%s234 + $0x10] sm:$0xff] %v239
                  %v241 = vld [vmem:[%s233 + $0x18] sm:$0xff]
                  %242 = vst [vmem:[%s234 + $0x18] sm:$0xff] %v241
                  %v243 = vld [vmem:[%s233 + $0x20] sm:$0xff]
                  %244 = vst [vmem:[%s234 + $0x20] sm:$0xff] %v243
                  %v245 = vld [vmem:[%s233 + $0x28] sm:$0xff]
                  %246 = vst [vmem:[%s234 + $0x28] sm:$0xff] %v245
                  %v247 = vld [vmem:[%s233 + $0x30] sm:$0xff]
                  %248 = vst [vmem:[%s234 + $0x30] sm:$0xff] %v247
                  %v249 = vld [vmem:[%s233 + $0x38] sm:$0xff]
                  %250 = vst [vmem:[%s234 + $0x38] sm:$0xff] %v249
                  %v251 = vld [vmem:[%s233 + $0x40] sm:$0xff]
                  %252 = vst [vmem:[%s234 + $0x40] sm:$0xff] %v251
                  %v253 = vld [vmem:[%s233 + $0x48] sm:$0xff]
                  %254 = vst [vmem:[%s234 + $0x48] sm:$0xff] %v253
                  %v255 = vld [vmem:[%s233 + $0x50] sm:$0xff]
                  %256 = vst [vmem:[%s234 + $0x50] sm:$0xff] %v255
                  %v257 = vld [vmem:[%s233 + $0x58] sm:$0xff]
                  %258 = vst [vmem:[%s234 + $0x58] sm:$0xff] %v257
                  %v259 = vld [vmem:[%s233 + $0x60] sm:$0xff]
                  %260 = vst [vmem:[%s234 + $0x60] sm:$0xff] %v259
                  %v261 = vld [vmem:[%s233 + $0x68] sm:$0xff]
                  %262 = vst [vmem:[%s234 + $0x68] sm:$0xff] %v261
                  %v263 = vld [vmem:[%s233 + $0x70] sm:$0xff]
                  %264 = vst [vmem:[%s234 + $0x70] sm:$0xff] %v263
                  %v265 = vld [vmem:[%s233 + $0x78] sm:$0xff]
                  %266 = vst [vmem:[%s234 + $0x78] sm:$0xff] %v265
                  %v267 = vld [vmem:[%s233 + $0x80] sm:$0xff]
                  %268 = vst [vmem:[%s234 + $0x80] sm:$0xff] %v267
                  %v269 = vld [vmem:[%s233 + $0x88] sm:$0xff]
                  %270 = vst [vmem:[%s234 + $0x88] sm:$0xff] %v269
                  %v271 = vld [vmem:[%s233 + $0x90] sm:$0xff]
                  %272 = vst [vmem:[%s234 + $0x90] sm:$0xff] %v271
                  %v273 = vld [vmem:[%s233 + $0x98] sm:$0xff]
                  %274 = vst [vmem:[%s234 + $0x98] sm:$0xff] %v273
                  %v275 = vld [vmem:[%s233 + $0xa0] sm:$0xff]
                  %276 = vst [vmem:[%s234 + $0xa0] sm:$0xff] %v275
                  %v277 = vld [vmem:[%s233 + $0xa8] sm:$0xff]
                  %278 = vst [vmem:[%s234 + $0xa8] sm:$0xff] %v277
                  %v279 = vld [vmem:[%s233 + $0xb0] sm:$0xff]
                  %280 = vst [vmem:[%s234 + $0xb0] sm:$0xff] %v279
                  %v281 = vld [vmem:[%s233 + $0xb8] sm:$0xff]
                  %282 = vst [vmem:[%s234 + $0xb8] sm:$0xff] %v281
                  %v283 = vld [vmem:[%s233 + $0x38] sm:$0xff]
                  %284 = vst [vmem:[%s234 + $0x10] sm:$0xff] %v283
                  %v285 = vld [vmem:[%s233 + $0x40] sm:$0xff]
                  %286 = vst [vmem:[%s234 + $0x18] sm:$0xff] %v285
                  %v287 = vld [vmem:[%s233 + $0x48] sm:$0xff]
                  %288 = vst [vmem:[%s234 + $0x20] sm:$0xff] %v287
                  %v289 = vld [vmem:[%s233 + $0x50] sm:$0xff]
                  %290 = vst [vmem:[%s234 + $0x28] sm:$0xff] %v289
                  %v291 = vld [vmem:[%s233 + $0x58] sm:$0xff]
                  %292 = vst [vmem:[%s234 + $0x30] sm:$0xff] %v291
                  %v293 = vld [vmem:[%s233 + $0x60] sm:$0xff]
                  %294 = vst [vmem:[%s234 + $0x38] sm:$0xff] %v293
                  %v295 = vld [vmem:[%s233 + $0x68] sm:$0xff]
                  %296 = vst [vmem:[%s234 + $0x40] sm:$0xff] %v295
                  %v297 = vld [vmem:[%s233 + $0x70] sm:$0xff]
                  %298 = vst [vmem:[%s234 + $0x48] sm:$0xff] %v297
                  %v299 = vld [vmem:[%s233 + $0x78] sm:$0xff]
                  %300 = vst [vmem:[%s234 + $0x50] sm:$0xff] %v299
                  %v301 = vld [vmem:[%s233 + $0x80] sm:$0xff]
                  %302 = vst [vmem:[%s234 + $0x58] sm:$0xff] %v301
                  %v303 = vld [vmem:[%s233 + $0x88] sm:$0xff]
                  %304 = vst [vmem:[%s234 + $0x60] sm:$0xff] %v303
                  %v305 = vld [vmem:[%s233 + $0x90] sm:$0xff]
                  %306 = vst [vmem:[%s234 + $0x68] sm:$0xff] %v305
                  %v307 = vld [vmem:[%s233 + $0x98] sm:$0xff]
                  %308 = vst [vmem:[%s234 + $0x70] sm:$0xff] %v307
                  %v309 = vld [vmem:[%s233 + $0xa0] sm:$0xff]
                  %310 = vst [vmem:[%s234 + $0x78] sm:$0xff] %v309
                  %v311 = vld [vmem:[%s233 + $0xa8] sm:$0xff]
                  %312 = vst [vmem:[%s234 + $0x80] sm:$0xff] %v311
                  %v313 = vld [vmem:[%s233 + $0xb0] sm:$0xff]
                  %314 = vst [vmem:[%s234 + $0x88] sm:$0xff] %v313
                  %v315 = vld [vmem:[%s233 + $0xb8] sm:$0xff]
                  %316 = vst [vmem:[%s234 + $0x90] sm:$0xff] %v315
                  %v317 = vld [vmem:[%s233 + $0xc0] sm:$0xff]
                  %318 = vst [vmem:[%s234 + $0x98] sm:$0xff] %v317
                  %v319 = vld [vmem:[%s233 + $0xc8] sm:$0xff]
                  %320 = vst [vmem:[%s234 + $0xa0] sm:$0xff] %v319
                  %v321 = vld [vmem:[%s233 + $0xd0] sm:$0xff]
                  %322 = vst [vmem:[%s234 + $0xa8] sm:$0xff] %v321
                  %v323 = vld [vmem:[%s233 + $0xd8] sm:$0xff]
                  %324 = vst [vmem:[%s234 + $0xb0] sm:$0xff] %v323
                  %v325 = vld [vmem:[%s233 + $0xe0] sm:$0xff]
                  %326 = vst [vmem:[%s234 + $0xb8] sm:$0xff] %v325
                  %v327 = vld [vmem:[%s233 + $0xe8] sm:$0xff]
                  %328 = vst [vmem:[%s234 + $0xc0] sm:$0xff] %v327
                  %v329 = vld [vmem:[%s233 + $0xf0] sm:$0xff]
                  %330 = vst [vmem:[%s234 + $0xc8] sm:$0xff] %v329
                  %v331 = vld [vmem:[%s233 + $0x70] sm:$0xff]
                  %332 = vst [vmem:[%s234 + $0x20] sm:$0xff] %v331
                  %v333 = vld [vmem:[%s233 + $0x78] sm:$0xff]
                  %334 = vst [vmem:[%s234 + $0x28] sm:$0xff] %v333
                  %v335 = vld [vmem:[%s233 + $0x80] sm:$0xff]
                  %336 = vst [vmem:[%s234 + $0x30] sm:$0xff] %v335
                  %v337 = vld [vmem:[%s233 + $0x88] sm:$0xff]
                  %338 = vst [vmem:[%s234 + $0x38] sm:$0xff] %v337
                  %v339 = vld [vmem:[%s233 + $0x90] sm:$0xff]
                  %340 = vst [vmem:[%s234 + $0x40] sm:$0xff] %v339
                  %v341 = vld [vmem:[%s233 + $0x98] sm:$0xff]
                  %342 = vst [vmem:[%s234 + $0x48] sm:$0xff] %v341
                  %v343 = vld [vmem:[%s233 + $0xa0] sm:$0xff]
                  %344 = vst [vmem:[%s234 + $0x50] sm:$0xff] %v343
                  %v345 = vld [vmem:[%s233 + $0xa8] sm:$0xff]
                  %346 = vst [vmem:[%s234 + $0x58] sm:$0xff] %v345
                  %v347 = vld [vmem:[%s233 + $0xb0] sm:$0xff]
                  %348 = vst [vmem:[%s234 + $0x60] sm:$0xff] %v347
                  %v349 = vld [vmem:[%s233 + $0xb8] sm:$0xff]
                  %350 = vst [vmem:[%s234 + $0x68] sm:$0xff] %v349
                  %v351 = vld [vmem:[%s233 + $0xc0] sm:$0xff]
                  %352 = vst [vmem:[%s234 + $0x70] sm:$0xff] %v351
                  %v353 = vld [vmem:[%s233 + $0xc8] sm:$0xff]
                  %354 = vst [vmem:[%s234 + $0x78] sm:$0xff] %v353
                  %v355 = vld [vmem:[%s233 + $0xd0] sm:$0xff]
                  %356 = vst [vmem:[%s234 + $0x80] sm:$0xff] %v355
                  %v357 = vld [vmem:[%s233 + $0xd8] sm:$0xff]
                  %358 = vst [vmem:[%s234 + $0x88] sm:$0xff] %v357
                  %v359 = vld [vmem:[%s233 + $0xe0] sm:$0xff]
                  %360 = vst [vmem:[%s234 + $0x90] sm:$0xff] %v359
                  %v361 = vld [vmem:[%s233 + $0xe8] sm:$0xff]
                  %362 = vst [vmem:[%s234 + $0x98] sm:$0xff] %v361
                  %v363 = vld [vmem:[%s233 + $0xf0] sm:$0xff]
                  %364 = vst [vmem:[%s234 + $0xa0] sm:$0xff] %v363
                  %v365 = vld [vmem:[%s233 + $0xf8] sm:$0xff]
                  %366 = vst [vmem:[%s234 + $0xa8] sm:$0xff] %v365
                  %v367 = vld [vmem:[%s233 + $0x100] sm:$0xff]
                  %368 = vst [vmem:[%s234 + $0xb0] sm:$0xff] %v367
                  %v369 = vld [vmem:[%s233 + $0x108] sm:$0xff]
                  %370 = vst [vmem:[%s234 + $0xb8] sm:$0xff] %v369
                  %v371 = vld [vmem:[%s233 + $0x110] sm:$0xff]
                  %372 = vst [vmem:[%s234 + $0xc0] sm:$0xff] %v371
                  %v373 = vld [vmem:[%s233 + $0x118] sm:$0xff]
                  %374 = vst [vmem:[%s234 + $0xc8] sm:$0xff] %v373
                  %v375 = vld [vmem:[%s233 + $0x120] sm:$0xff]
                  %376 = vst [vmem:[%s234 + $0xd0] sm:$0xff] %v375
                  %v377 = vld [vmem:[%s233 + $0x128] sm:$0xff]
                  %378 = vst [vmem:[%s234 + $0xd8] sm:$0xff] %v377
                  %s379 = sadd.s32 1, %s232
                  %p380 = scmp.ge.s32.totalorder %s379, %s222
                  %s381 = scalar_select %p380, 0, %s379
                  %s382 = smul.u32 %s381, 192
                  %s383 = smul.u32 %s381, 192
                  %s384 = scalar_lea.vmem %s189, %s382
                  %s385 = scalar_lea.vmem %s179, %s383 [#allocation2]
                $region56: #{tpu_custom_call.1} parent=50 // loop_footer
                  %s229 = sadd.s32 %s227, 1
                $region57: #{tpu_custom_call.1} parent=50 // loop_footer_branch
                  %226 = sbr.rel target = $region53
                $region58: #{tpu_custom_call.1} parent=50 // loop_exit
                  _
                %s386 = sdiv.u32.pop %s221, 24
                %s387 = srem.u32.pop %s221, 24
                %s388 = smul.u32 %s386, 24
                %s389 = smul.u32 128, %s388
                %s390 = sshra.s32 %s389, 4
                %s391 = scalar_lea.vmem %s189, %s390
                %s392 = smul.u32 128, %s388
                %s393 = sshra.s32 %s392, 4
                %s394 = scalar_lea.vmem %s179, %s393 [#allocation2]
                // While loop
                $region59: #{tpu_custom_call.1} parent=50 // loop_pre_header
                  _
                $region60: #{tpu_custom_call.1} parent=50 // loop_header
                  %s398 = sphi 0, %s400
                  %p399 = scmp.ge.s32.totalorder %s398, %s387
                  %s403 = sphi 0, %s414
                  %s404 = sphi %s391, %s417
                  %s405 = sphi %s394, %s418
                $region61: #{tpu_custom_call.1} parent=50 // loop_header_branch
                  %402 = sbr.rel (%p399) target = $region65
                $region62: #{tpu_custom_call.1} parent=50 // loop_body
                  %v406 = vld [vmem:[%s404] sm:$0xff]
                  %407 = vst [vmem:[%s405] sm:$0xff] %v406
                  %v408 = vld [vmem:[%s404 + $0x38] sm:$0xff]
                  %409 = vst [vmem:[%s405 + $0x10] sm:$0xff] %v408
                  %v410 = vld [vmem:[%s404 + $0x70] sm:$0xff]
                  %411 = vst [vmem:[%s405 + $0x20] sm:$0xff] %v410
                  %s412 = sadd.s32 1, %s403
                  %p413 = scmp.ge.s32.totalorder %s412, %s387
                  %s414 = scalar_select %p413, 0, %s412
                  %s415 = smul.u32 %s414, 8
                  %s416 = smul.u32 %s414, 8
                  %s417 = scalar_lea.vmem %s391, %s415
                  %s418 = scalar_lea.vmem %s394, %s416 [#allocation2]
                $region63: #{tpu_custom_call.1} parent=50 // loop_footer
                  %s400 = sadd.s32 %s398, 1
                $region64: #{tpu_custom_call.1} parent=50 // loop_footer_branch
                  %397 = sbr.rel target = $region60
                $region65: #{tpu_custom_call.1} parent=50 // loop_exit
                  _
              $region51: #{tpu_custom_call.1} parent=35 // pred_fallthru
                _
              %p419 = pneg %p217
              // Predicated region
              $region66: #{tpu_custom_call.1} parent=35 // pred_check
                _
              $region67: #{tpu_custom_call.1} parent=35 // pred_check_branch
                %421 = sbr.rel (%p217) target = $region69
              $region68: #{tpu_custom_call.1} parent=35 // pred_region
                %s422 = sand.u32 %s190, 7
                %s423 = ssub.s32 %s190, %s422
                %s424 = scalar_lea.vmem %s189, %s423
                %s425 = ssub.s32 %s190, %s422
                %s426 = scalar_lea.vmem %s179, %s425 [#allocation2]
                %s427 = sshrl.u32 %s190, 3
                %s428 = sdiv.u32.pop %s427, 24
                %s429 = srem.u32.pop %s427, 24
                // While loop
                $region70: #{tpu_custom_call.1} parent=68 // loop_pre_header
                  _
                $region71: #{tpu_custom_call.1} parent=68 // loop_header
                  %s433 = sphi 0, %s435
                  %p434 = scmp.ge.s32.totalorder %s433, %s428
                  %s438 = sphi 0, %s587
                  %s439 = sphi %s189, %s590
                  %s440 = sphi %s179, %s591
                $region72: #{tpu_custom_call.1} parent=68 // loop_header_branch
                  %437 = sbr.rel (%p434) target = $region76
                $region73: #{tpu_custom_call.1} parent=68 // loop_body
                  %v441 = vld [vmem:[%s439] sm:$0xff]
                  %442 = vst [vmem:[%s440] sm:$0xff] %v441
                  %v443 = vld [vmem:[%s439 + $0x8] sm:$0xff]
                  %444 = vst [vmem:[%s440 + $0x8] sm:$0xff] %v443
                  %v445 = vld [vmem:[%s439 + $0x10] sm:$0xff]
                  %446 = vst [vmem:[%s440 + $0x10] sm:$0xff] %v445
                  %v447 = vld [vmem:[%s439 + $0x18] sm:$0xff]
                  %448 = vst [vmem:[%s440 + $0x18] sm:$0xff] %v447
                  %v449 = vld [vmem:[%s439 + $0x20] sm:$0xff]
                  %450 = vst [vmem:[%s440 + $0x20] sm:$0xff] %v449
                  %v451 = vld [vmem:[%s439 + $0x28] sm:$0xff]
                  %452 = vst [vmem:[%s440 + $0x28] sm:$0xff] %v451
                  %v453 = vld [vmem:[%s439 + $0x30] sm:$0xff]
                  %454 = vst [vmem:[%s440 + $0x30] sm:$0xff] %v453
                  %v455 = vld [vmem:[%s439 + $0x38] sm:$0xff]
                  %456 = vst [vmem:[%s440 + $0x38] sm:$0xff] %v455
                  %v457 = vld [vmem:[%s439 + $0x40] sm:$0xff]
                  %458 = vst [vmem:[%s440 + $0x40] sm:$0xff] %v457
                  %v459 = vld [vmem:[%s439 + $0x48] sm:$0xff]
                  %460 = vst [vmem:[%s440 + $0x48] sm:$0xff] %v459
                  %v461 = vld [vmem:[%s439 + $0x50] sm:$0xff]
                  %462 = vst [vmem:[%s440 + $0x50] sm:$0xff] %v461
                  %v463 = vld [vmem:[%s439 + $0x58] sm:$0xff]
                  %464 = vst [vmem:[%s440 + $0x58] sm:$0xff] %v463
                  %v465 = vld [vmem:[%s439 + $0x60] sm:$0xff]
                  %466 = vst [vmem:[%s440 + $0x60] sm:$0xff] %v465
                  %v467 = vld [vmem:[%s439 + $0x68] sm:$0xff]
                  %468 = vst [vmem:[%s440 + $0x68] sm:$0xff] %v467
                  %v469 = vld [vmem:[%s439 + $0x70] sm:$0xff]
                  %470 = vst [vmem:[%s440 + $0x70] sm:$0xff] %v469
                  %v471 = vld [vmem:[%s439 + $0x78] sm:$0xff]
                  %472 = vst [vmem:[%s440 + $0x78] sm:$0xff] %v471
                  %v473 = vld [vmem:[%s439 + $0x80] sm:$0xff]
                  %474 = vst [vmem:[%s440 + $0x80] sm:$0xff] %v473
                  %v475 = vld [vmem:[%s439 + $0x88] sm:$0xff]
                  %476 = vst [vmem:[%s440 + $0x88] sm:$0xff] %v475
                  %v477 = vld [vmem:[%s439 + $0x90] sm:$0xff]
                  %478 = vst [vmem:[%s440 + $0x90] sm:$0xff] %v477
                  %v479 = vld [vmem:[%s439 + $0x98] sm:$0xff]
                  %480 = vst [vmem:[%s440 + $0x98] sm:$0xff] %v479
                  %v481 = vld [vmem:[%s439 + $0xa0] sm:$0xff]
                  %482 = vst [vmem:[%s440 + $0xa0] sm:$0xff] %v481
                  %v483 = vld [vmem:[%s439 + $0xa8] sm:$0xff]
                  %484 = vst [vmem:[%s440 + $0xa8] sm:$0xff] %v483
                  %v485 = vld [vmem:[%s439 + $0xb0] sm:$0xff]
                  %486 = vst [vmem:[%s440 + $0xb0] sm:$0xff] %v485
                  %v487 = vld [vmem:[%s439 + $0xb8] sm:$0xff]
                  %488 = vst [vmem:[%s440 + $0xb8] sm:$0xff] %v487
                  %v489 = vld [vmem:[%s439 + $0x38] sm:$0xff]
                  %490 = vst [vmem:[%s440 + $0x10] sm:$0xff] %v489
                  %v491 = vld [vmem:[%s439 + $0x40] sm:$0xff]
                  %492 = vst [vmem:[%s440 + $0x18] sm:$0xff] %v491
                  %v493 = vld [vmem:[%s439 + $0x48] sm:$0xff]
                  %494 = vst [vmem:[%s440 + $0x20] sm:$0xff] %v493
                  %v495 = vld [vmem:[%s439 + $0x50] sm:$0xff]
                  %496 = vst [vmem:[%s440 + $0x28] sm:$0xff] %v495
                  %v497 = vld [vmem:[%s439 + $0x58] sm:$0xff]
                  %498 = vst [vmem:[%s440 + $0x30] sm:$0xff] %v497
                  %v499 = vld [vmem:[%s439 + $0x60] sm:$0xff]
                  %500 = vst [vmem:[%s440 + $0x38] sm:$0xff] %v499
                  %v501 = vld [vmem:[%s439 + $0x68] sm:$0xff]
                  %502 = vst [vmem:[%s440 + $0x40] sm:$0xff] %v501
                  %v503 = vld [vmem:[%s439 + $0x70] sm:$0xff]
                  %504 = vst [vmem:[%s440 + $0x48] sm:$0xff] %v503
                  %v505 = vld [vmem:[%s439 + $0x78] sm:$0xff]
                  %506 = vst [vmem:[%s440 + $0x50] sm:$0xff] %v505
                  %v507 = vld [vmem:[%s439 + $0x80] sm:$0xff]
                  %508 = vst [vmem:[%s440 + $0x58] sm:$0xff] %v507
                  %v509 = vld [vmem:[%s439 + $0x88] sm:$0xff]
                  %510 = vst [vmem:[%s440 + $0x60] sm:$0xff] %v509
                  %v511 = vld [vmem:[%s439 + $0x90] sm:$0xff]
                  %512 = vst [vmem:[%s440 + $0x68] sm:$0xff] %v511
                  %v513 = vld [vmem:[%s439 + $0x98] sm:$0xff]
                  %514 = vst [vmem:[%s440 + $0x70] sm:$0xff] %v513
                  %v515 = vld [vmem:[%s439 + $0xa0] sm:$0xff]
                  %516 = vst [vmem:[%s440 + $0x78] sm:$0xff] %v515
                  %v517 = vld [vmem:[%s439 + $0xa8] sm:$0xff]
                  %518 = vst [vmem:[%s440 + $0x80] sm:$0xff] %v517
                  %v519 = vld [vmem:[%s439 + $0xb0] sm:$0xff]
                  %520 = vst [vmem:[%s440 + $0x88] sm:$0xff] %v519
                  %v521 = vld [vmem:[%s439 + $0xb8] sm:$0xff]
                  %522 = vst [vmem:[%s440 + $0x90] sm:$0xff] %v521
                  %v523 = vld [vmem:[%s439 + $0xc0] sm:$0xff]
                  %524 = vst [vmem:[%s440 + $0x98] sm:$0xff] %v523
                  %v525 = vld [vmem:[%s439 + $0xc8] sm:$0xff]
                  %526 = vst [vmem:[%s440 + $0xa0] sm:$0xff] %v525
                  %v527 = vld [vmem:[%s439 + $0xd0] sm:$0xff]
                  %528 = vst [vmem:[%s440 + $0xa8] sm:$0xff] %v527
                  %v529 = vld [vmem:[%s439 + $0xd8] sm:$0xff]
                  %530 = vst [vmem:[%s440 + $0xb0] sm:$0xff] %v529
                  %v531 = vld [vmem:[%s439 + $0xe0] sm:$0xff]
                  %532 = vst [vmem:[%s440 + $0xb8] sm:$0xff] %v531
                  %v533 = vld [vmem:[%s439 + $0xe8] sm:$0xff]
                  %534 = vst [vmem:[%s440 + $0xc0] sm:$0xff] %v533
                  %v535 = vld [vmem:[%s439 + $0xf0] sm:$0xff]
                  %536 = vst [vmem:[%s440 + $0xc8] sm:$0xff] %v535
                  %v537 = vld [vmem:[%s439 + $0x70] sm:$0xff]
                  %538 = vst [vmem:[%s440 + $0x20] sm:$0xff] %v537
                  %v539 = vld [vmem:[%s439 + $0x78] sm:$0xff]
                  %540 = vst [vmem:[%s440 + $0x28] sm:$0xff] %v539
                  %v541 = vld [vmem:[%s439 + $0x80] sm:$0xff]
                  %542 = vst [vmem:[%s440 + $0x30] sm:$0xff] %v541
                  %v543 = vld [vmem:[%s439 + $0x88] sm:$0xff]
                  %544 = vst [vmem:[%s440 + $0x38] sm:$0xff] %v543
                  %v545 = vld [vmem:[%s439 + $0x90] sm:$0xff]
                  %546 = vst [vmem:[%s440 + $0x40] sm:$0xff] %v545
                  %v547 = vld [vmem:[%s439 + $0x98] sm:$0xff]
                  %548 = vst [vmem:[%s440 + $0x48] sm:$0xff] %v547
                  %v549 = vld [vmem:[%s439 + $0xa0] sm:$0xff]
                  %550 = vst [vmem:[%s440 + $0x50] sm:$0xff] %v549
                  %v551 = vld [vmem:[%s439 + $0xa8] sm:$0xff]
                  %552 = vst [vmem:[%s440 + $0x58] sm:$0xff] %v551
                  %v553 = vld [vmem:[%s439 + $0xb0] sm:$0xff]
                  %554 = vst [vmem:[%s440 + $0x60] sm:$0xff] %v553
                  %v555 = vld [vmem:[%s439 + $0xb8] sm:$0xff]
                  %556 = vst [vmem:[%s440 + $0x68] sm:$0xff] %v555
                  %v557 = vld [vmem:[%s439 + $0xc0] sm:$0xff]
                  %558 = vst [vmem:[%s440 + $0x70] sm:$0xff] %v557
                  %v559 = vld [vmem:[%s439 + $0xc8] sm:$0xff]
                  %560 = vst [vmem:[%s440 + $0x78] sm:$0xff] %v559
                  %v561 = vld [vmem:[%s439 + $0xd0] sm:$0xff]
                  %562 = vst [vmem:[%s440 + $0x80] sm:$0xff] %v561
                  %v563 = vld [vmem:[%s439 + $0xd8] sm:$0xff]
                  %564 = vst [vmem:[%s440 + $0x88] sm:$0xff] %v563
                  %v565 = vld [vmem:[%s439 + $0xe0] sm:$0xff]
                  %566 = vst [vmem:[%s440 + $0x90] sm:$0xff] %v565
                  %v567 = vld [vmem:[%s439 + $0xe8] sm:$0xff]
                  %568 = vst [vmem:[%s440 + $0x98] sm:$0xff] %v567
                  %v569 = vld [vmem:[%s439 + $0xf0] sm:$0xff]
                  %570 = vst [vmem:[%s440 + $0xa0] sm:$0xff] %v569
                  %v571 = vld [vmem:[%s439 + $0xf8] sm:$0xff]
                  %572 = vst [vmem:[%s440 + $0xa8] sm:$0xff] %v571
                  %v573 = vld [vmem:[%s439 + $0x100] sm:$0xff]
                  %574 = vst [vmem:[%s440 + $0xb0] sm:$0xff] %v573
                  %v575 = vld [vmem:[%s439 + $0x108] sm:$0xff]
                  %576 = vst [vmem:[%s440 + $0xb8] sm:$0xff] %v575
                  %v577 = vld [vmem:[%s439 + $0x110] sm:$0xff]
                  %578 = vst [vmem:[%s440 + $0xc0] sm:$0xff] %v577
                  %v579 = vld [vmem:[%s439 + $0x118] sm:$0xff]
                  %580 = vst [vmem:[%s440 + $0xc8] sm:$0xff] %v579
                  %v581 = vld [vmem:[%s439 + $0x120] sm:$0xff]
                  %582 = vst [vmem:[%s440 + $0xd0] sm:$0xff] %v581
                  %v583 = vld [vmem:[%s439 + $0x128] sm:$0xff]
                  %584 = vst [vmem:[%s440 + $0xd8] sm:$0xff] %v583
                  %s585 = sadd.s32 1, %s438
                  %p586 = scmp.ge.s32.totalorder %s585, %s428
                  %s587 = scalar_select %p586, 0, %s585
                  %s588 = smul.u32 %s587, 192
                  %s589 = smul.u32 %s587, 192
                  %s590 = scalar_lea.vmem %s189, %s588
                  %s591 = scalar_lea.vmem %s179, %s589 [#allocation2]
                $region74: #{tpu_custom_call.1} parent=68 // loop_footer
                  %s435 = sadd.s32 %s433, 1
                $region75: #{tpu_custom_call.1} parent=68 // loop_footer_branch
                  %432 = sbr.rel target = $region71
                $region76: #{tpu_custom_call.1} parent=68 // loop_exit
                  _
                %s592 = sdiv.u32.pop %s427, 24
                %s593 = srem.u32.pop %s427, 24
                %s594 = smul.u32 %s592, 24
                %s595 = smul.u32 128, %s594
                %s596 = sshra.s32 %s595, 4
                %s597 = scalar_lea.vmem %s189, %s596
                %s598 = smul.u32 128, %s594
                %s599 = sshra.s32 %s598, 4
                %s600 = scalar_lea.vmem %s179, %s599 [#allocation2]
                // While loop
                $region77: #{tpu_custom_call.1} parent=68 // loop_pre_header
                  _
                $region78: #{tpu_custom_call.1} parent=68 // loop_header
                  %s604 = sphi 0, %s606
                  %p605 = scmp.ge.s32.totalorder %s604, %s593
                  %s609 = sphi 0, %s620
                  %s610 = sphi %s597, %s623
                  %s611 = sphi %s600, %s624
                $region79: #{tpu_custom_call.1} parent=68 // loop_header_branch
                  %608 = sbr.rel (%p605) target = $region83
                $region80: #{tpu_custom_call.1} parent=68 // loop_body
                  %v612 = vld [vmem:[%s610] sm:$0xff]
                  %613 = vst [vmem:[%s611] sm:$0xff] %v612
                  %v614 = vld [vmem:[%s610 + $0x38] sm:$0xff]
                  %615 = vst [vmem:[%s611 + $0x10] sm:$0xff] %v614
                  %v616 = vld [vmem:[%s610 + $0x70] sm:$0xff]
                  %617 = vst [vmem:[%s611 + $0x20] sm:$0xff] %v616
                  %s618 = sadd.s32 1, %s609
                  %p619 = scmp.ge.s32.totalorder %s618, %s593
                  %s620 = scalar_select %p619, 0, %s618
                  %s621 = smul.u32 %s620, 8
                  %s622 = smul.u32 %s620, 8
                  %s623 = scalar_lea.vmem %s597, %s621
                  %s624 = scalar_lea.vmem %s600, %s622 [#allocation2]
                $region81: #{tpu_custom_call.1} parent=68 // loop_footer
                  %s606 = sadd.s32 %s604, 1
                $region82: #{tpu_custom_call.1} parent=68 // loop_footer_branch
                  %603 = sbr.rel target = $region78
                $region83: #{tpu_custom_call.1} parent=68 // loop_exit
                  _
                %s625 = sshllo.u32 0, %s422
                loop: start=0, step=1, limit=1
                $region84: #{tpu_custom_call.1} parent=68 // loop_pre_header
                  _
                $region85: #{tpu_custom_call.1} parent=68 // loop_header
                  %s627 = sphi 0, %s631
                  %p628 = scmp.ge.s32.totalorder %s627, 1
                  %s632 = sphi %s424, %s424
                  %s633 = sphi %s426, %s426
                $region86: #{tpu_custom_call.1} parent=68 // loop_header_branch
                  %630 = sbr.rel (%p628) target = $region90
                $region87: #{tpu_custom_call.1} parent=68 // loop_body
                  %v634 = vld [vmem:[%s632] sm:%s625]
                  %635 = vst [vmem:[%s633] sm:%s625] %v634
                  %v636 = vld [vmem:[%s632 + $0x38] sm:%s625]
                  %637 = vst [vmem:[%s633 + $0x10] sm:%s625] %v636
                  %v638 = vld [vmem:[%s632 + $0x70] sm:%s625]
                  %639 = vst [vmem:[%s633 + $0x20] sm:%s625] %v638
                $region88: #{tpu_custom_call.1} parent=68 // loop_footer
                  %s631 = sadd.s32 1, %s627
                $region89: #{tpu_custom_call.1} parent=68 // loop_footer_branch
                  %626 = sbr.rel target = $region85
                $region90: #{tpu_custom_call.1} parent=68 // loop_exit
                  _
              $region69: #{tpu_custom_call.1} parent=35 // pred_fallthru
                _
            $region36: #{tpu_custom_call.1} parent=31 // pred_fallthru
              _
            // Predicated region
            $region37: #{tpu_custom_call.1} parent=31 // pred_check
              %p198 = pneg %p194
            $region38: #{tpu_custom_call.1} parent=31 // pred_check_branch
              %200 = sbr.rel (%p198) target = $region40
            $region39: #{tpu_custom_call.1} parent=31 // pred_region
              %s201 = sshllo.u32 0, %s190
              loop: start=0, step=1, limit=1
              $region41: #{tpu_custom_call.1} parent=39 // loop_pre_header
                _
              $region42: #{tpu_custom_call.1} parent=39 // loop_header
                %s203 = sphi 0, %s207
                %p204 = scmp.ge.s32.totalorder %s203, 1
                %s208 = sphi %s189, %s189
                %s209 = sphi %s179, %s179
              $region43: #{tpu_custom_call.1} parent=39 // loop_header_branch
                %206 = sbr.rel (%p204) target = $region47
              $region44: #{tpu_custom_call.1} parent=39 // loop_body
                %v210 = vld [vmem:[%s208] sm:%s201]
                %211 = vst [vmem:[%s209] sm:%s201] %v210
                %v212 = vld [vmem:[%s208 + $0x38] sm:%s201]
                %213 = vst [vmem:[%s209 + $0x10] sm:%s201] %v212
                %v214 = vld [vmem:[%s208 + $0x70] sm:%s201]
                %215 = vst [vmem:[%s209 + $0x20] sm:%s201] %v214
              $region45: #{tpu_custom_call.1} parent=39 // loop_footer
                %s207 = sadd.s32 1, %s203
              $region46: #{tpu_custom_call.1} parent=39 // loop_footer_branch
                %202 = sbr.rel target = $region42
              $region47: #{tpu_custom_call.1} parent=39 // loop_exit
                _
            $region40: #{tpu_custom_call.1} parent=31 // pred_fallthru
              _
          $region32: #{tpu_custom_call.1} parent=27 // pred_fallthru
            _
          %640 = vnop
        $region28: #{tpu_custom_call.1} parent=23 // pred_fallthru
          _
        // Predicated region
        $region91: #{tpu_custom_call.1} parent=23 // pred_check
          %p641 = pneg %p72
        $region92: #{tpu_custom_call.1} parent=23 // pred_check_branch
          %643 = sbr.rel (%p641) target = $region94
        $region93: #{tpu_custom_call.1} parent=23 // pred_region
          %p644 = scmp.lt.s32.totalorder %s17, 1
          %s645 = scalar_select %p644, %s17, 1
          %p646 = scmp.lt.s32.totalorder %s18, 3
          %s647 = scalar_select %p646, %s18, 3
          %s648 = smul.addr %s645, 4
          %s649 = sadd.s32 %s647, %s648
          %s650 = smul.addr %s649, 8
          %s651 = scalar_lea.vmem %s1, %s650
        $region94: #{tpu_custom_call.1} parent=23 // pred_fallthru
          _
      $region24: #{tpu_custom_call.1} parent=5 // pred_fallthru
        _
      %p652 = scmp.le.s32.totalorder 1, %s10
      %p653 = scmp.lt.s32.totalorder %s10, 9
      %p654 = pnand %p652, %p653
      %p655 = pneg %p654
      // Predicated region
      $region95: #{tpu_custom_call.1} parent=5 // pred_check
        _
      $region96: #{tpu_custom_call.1} parent=5 // pred_check_branch
        %657 = sbr.rel (%p654) target = $region98
      $region97: #{tpu_custom_call.1} parent=5 // pred_region
        %s658 = ssub.s32 %s10, 1
        %s659 = sand.u32 %s37, 1
        %s660 = sand.u32 %s37, 1
        %s661 = smul.addr %s660, 48
        %s662 = scalar_lea.vmem [#allocation2], %s661
        // Predicated region
        $region99: #{tpu_custom_call.1} parent=97 // pred_check
          %p663 = pneg %p50
        $region100: #{tpu_custom_call.1} parent=97 // pred_check_branch
          %665 = sbr.rel (%p663) target = $region102
        $region101: #{tpu_custom_call.1} parent=97 // pred_region
          _
        $region102: #{tpu_custom_call.1} parent=97 // pred_fallthru
          _
        %s666 = sand.u32 %s37, 1
        %s667 = sand.u32 %s37, 1
        %s668 = smul.addr %s667, 48
        %s669 = scalar_lea.vmem [#allocation2], %s668
        %p670 = pneg %p50
        %p671 = pneg %p47
        %p672 = scmp.lt.s32.totalorder %s19, 1
        %s673 = scalar_select %p672, %s19, 1
        %p674 = scmp.lt.s32.totalorder %s20, 3
        %s675 = scalar_select %p674, %s20, 3
        %s676 = smul.addr %s673, 4
        %s677 = sadd.s32 %s675, %s676
        %s678 = smul.addr %s677, 8
        %s679 = scalar_lea.vmem %s1, %s678
        %p680 = pneg %p78
        %p681 = pneg %p75
        %p682 = pneg %p99
        %p683 = pneg %p96
        %p684 = pneg %p120
        %p685 = pneg %p117
        %p686 = pneg %p148
        %p687 = pneg %p145
        %s688 = sand.u32 %s135, 1
        %s689 = sand.u32 %s135, 1
        %s690 = smul.addr %s689, 32
        %s691 = scalar_lea.vmem [#allocation3], %s690
        %s692 = smul.u32 2, %s20
        %s693 = ssub.s32 7, %s692
        %p694 = scmp.lt.s32.totalorder %s693, 2
        %s695 = scalar_select %p694, %s693, 2
        %s696 = smul.u32 384, %s695
        %p697 = scmp.lt.s32.totalorder %s19, 1
        %s698 = scalar_select %p697, %s19, 1
        %p699 = scmp.lt.s32.totalorder %s20, 3
        %s700 = scalar_select %p699, %s20, 3
        %s701 = smul.addr %s698, 4
        %s702 = sadd.s32 %s700, %s701
        %s703 = smul.addr %s702, 8
        %s704 = scalar_lea.vmem %s1, %s703
        %s705 = smul.u32 2, %s20
        %s706 = ssub.s32 7, %s705
        %p707 = scmp.lt.s32.totalorder %s706, 2
        %s708 = scalar_select %p707, %s706, 2
        %s709 = smul.u32 256, %s708
        %v710 = vld [vmem:[%s662] sm:$0xff]
        %v711 = vld [vmem:[%s662 + $0x8] sm:$0xff]
        %v712 = vld [vmem:[%s662 + $0x10] sm:$0xff]
        %v713 = vld [vmem:[%s662 + $0x18] sm:$0xff]
        %v714 = vld [vmem:[%s662 + $0x20] sm:$0xf]
        %v715 = vld [vmem:[%s662 + $0x28] sm:$0xf]
        %v716 = vld [vmem:[%s2] sm:$0xff]
        %v717 = vld [vmem:[%s2 + $0x8] sm:$0x7f]
        %vm718 = vcmask 162816
        %v720 = vsel %vm718, %v716, 0
        %v723 = vsel %vm718, %v717, 0
        %vm725 = vcmask 1043456
        %v727 = vsel %vm725, %v714, 0
        %v730 = vsel %vm725, %v715, 0
        %732 = vmatprep.subr.mxu0 %v711
        %733 = vmatpush1.msra.mxu0 %v710
        %734 = vmatprep.subr.mxu0 %v713
        %735 = vmatpush1.msra.mxu0 %v712
        %736 = vmatprep.subr.mxu0 %v730
        %737 = vmatpush1.msra.mxu0 %v727
        %738 = vmatprep.subr.mxu0 0.0
        %739 = vmatpush1.msra.mxu0 0.0
        %740 = vmatprep.subr.mxu0 0.0
        %741 = vmatpush1.msra.mxu0 0.0
        %742 = vmatprep.subr.mxu0 0.0
        %743 = vmatpush1.msra.mxu0 0.0
        %744 = vmatprep.subr.mxu0 0.0
        %745 = vmatpush1.msra.mxu0 0.0
        %746 = vmatprep.subr.mxu0 0.0
        %747 = vmatpush1.msra.mxu0 0.0
        %748 = vmatprep.subr.mxu0 0.0
        %749 = vmatpush1.msra.mxu0 0.0
        %750 = vmatprep.subr.mxu0 0.0
        %751 = vmatpush1.msra.mxu0 0.0
        %752 = vmatprep.subr.mxu0 0.0
        %753 = vmatpush1.msra.mxu0 0.0
        %754 = vmatprep.subr.mxu0 0.0
        %755 = vmatpush1.msra.mxu0 0.0
        %756 = vmatprep.subr.mxu0 0.0
        %757 = vmatpush1.msra.mxu0 0.0
        %758 = vmatprep.subr.mxu0 0.0
        %759 = vmatpush1.msra.mxu0 0.0
        %760 = vmatprep.subr.mxu0 0.0
        %761 = vmatpush1.msra.mxu0 0.0
        %762 = vmatprep.subr.mxu0 0.0
        %763 = vmatpush1.msra.mxu0 0.0
        %764 = vmatprep.subr.mxu0 0.0
        %765 = vmatpush1.msra.mxu0 0.0
        %766 = vmatprep.subr.mxu0 0.0
        %767 = vmatpush1.msra.mxu0 0.0
        %768 = vmatprep.subr.mxu0 0.0
        %769 = vmatpush1.msra.mxu0 0.0
        %770 = vmatprep.subr.mxu0 0.0
        %771 = vmatpush1.msra.mxu0 0.0
        %772 = vmatprep.subr.mxu0 0.0
        %773 = vmatpush1.msra.mxu0 0.0
        %774 = vmatprep.subr.mxu0 0.0
        %775 = vmatpush1.msra.mxu0 0.0
        %776 = vmatprep.subr.mxu0 0.0
        %777 = vmatpush1.msra.mxu0 0.0
        %778 = vmatprep.subr.mxu0 0.0
        %779 = vmatpush1.msra.mxu0 0.0
        %780 = vmatprep.subr.mxu0 0.0
        %781 = vmatpush1.msra.mxu0 0.0
        %782 = vmatprep.subr.mxu0 0.0
        %783 = vmatpush1.msra.mxu0 0.0
        %784 = vmatprep.subr.mxu0 0.0
        %785 = vmatpush1.msra.mxu0 0.0
        %786 = vmatprep.subr.mxu0 0.0
        %787 = vmatpush1.msra.mxu0 0.0
        %788 = vmatprep.subr.mxu0 0.0
        %789 = vmatpush1.msra.mxu0 0.0
        %790 = vmatprep.subr.mxu0 0.0
        %791 = vmatpush1.msra.mxu0 0.0
        %792 = vmatprep.subr.mxu0 0.0
        %793 = vmatpush1.msra.mxu0 0.0
        %794 = vmatprep.subr.mxu0 0.0
        %795 = vmatpush1.msra.mxu0 0.0
        %796 = vmatprep.mubr.f32.mxu0 0.0
        %797 = vmatmul.mubr.f32.gmra.mrb[0].mxu0 %v720
        %v798 = vpop.f32.mrb[0].mxu0
        %v799 = vadd.f32 0.0, %v798
        %v800 = vpop.f32.mrb[0].mxu0
        %v801 = vadd.f32 0.0, %v800
        %802 = vmatprep.mubr.f32.mxu0 0.0
        %803 = vmatmul.mubr.f32.gmra.mrb[0].mxu0 %v723
        %v804 = vpop.f32.mrb[0].mxu0
        %v805 = vadd.f32 0.0, %v804
        %v806 = vpop.f32.mrb[0].mxu0
        %v807 = vadd.f32 0.0, %v806
        %808 = vdwg.mxu0
        %v809 = vmul.f32 %v714, 0.25
        %v810 = vmul.f32 %v715, 0.25
        %v811 = vlaneseq
        %v812 = vshrl.u32 %v811, 7
        %v813 = vsub.s32 3, %v812
        %v814 = vrot.slane %v809, %v813
        %v815 = vlaneseq
        %v816 = vshrl.u32 %v815, 7
        %v817 = vsub.s32 3, %v816
        %v818 = vrot.slane %v810, %v817
        %v819 = vadd.f32 %v712, %v814
        %v820 = vadd.f32 %v713, %v818
        %v821 = vadd.f32 %v714, %v814
        %v822 = vadd.f32 %v715, %v818
        %v823 = vld [vmem:[%s704] sm:$0x1f]
        %v824 = vmul.f32 %v823, 0.25
        %v825 = vlaneseq
        %v826 = vshrl.u32 %v825, 7
        %v827 = vsub.s32 4, %v826
        %v828 = vrot.slane %v824, %v827
        %v829 = vadd.f32 %v823, %v828
        %vm834 = vcmask 1040384
        %v835 = vrot.slane %v819, 7
        %v836 = vrot.slane %v821, 7
        %v837 = vsel %vm834, %v835, %v836
        %v838 = vrot.slane %v820, 7
        %v839 = vrot.slane %v822, 7
        %v840 = vsel %vm834, %v838, %v839
        %841 = vrot.lane.b32.xlu0 %v837, 2
        %v842 = vpop.permute.xlu0 %841
        %843 = vrot.lane.b32.xlu0 %v840, 2
        %v844 = vpop.permute.xlu0 %843
        %vm845 = vcmask 15360
        %v846 = vsel %vm845, %v842, %v844
        %v850 = vsel %vm845, %v829, %v842
        %v851 = vsel %vm845, %v844, %v829
        %s852 = smul.u32 %s20, 256
        %s853 = ssub.s32 895, %s852
        %v854 = vlaneseq
        %v855 = vand.u32 %v854, 127
        %v856 = vadd.s32 %v855, 128
        %v857 = vstv %s853
        %vm858 = vcmp.ge.s32.totalorder %v855, %v857
        %vm859 = vcmp.ge.s32.totalorder %v856, %v857
        %v860 = vsel %vm858, 1, 0
        %v861 = vsel %vm859, 1, 0
        %vm862 = vcmp.eq.s32.totalorder %v860, 1
        %vm863 = vcmp.eq.s32.totalorder %v861, 1
        %866 = vrot.lane.b32.xlu0 %v850, 125
        %v867 = vpop.permute.xlu0 %866
        %868 = vrot.lane.b32.xlu0 %v846, 125
        %v869 = vpop.permute.xlu0 %868
        %870 = vrot.lane.b32.xlu0 %v851, 125
        %v871 = vpop.permute.xlu0 %870
        %vm872 = vcmask 1022976
        %v873 = vsel %vm872, %v867, %v869
        %v874 = vsel %vm872, %v869, %v871
        %v877 = vsel %vm862, 0.25, %v873
        %v878 = vsel %vm863, 0.25, %v874
        %s879 = ssub.s32 894, %s852
        %v880 = vstv %s879
        %vm881 = vcmp.ge.s32.totalorder %v855, %v880
        %vm882 = vcmp.ge.s32.totalorder %v856, %v880
        %v883 = vsel %vm881, 1, 0
        %v884 = vsel %vm882, 1, 0
        %vm885 = vcmp.eq.s32.totalorder %v883, 1
        %vm886 = vcmp.eq.s32.totalorder %v884, 1
        %887 = vrot.lane.b32.xlu0 %v850, 124
        %v888 = vpop.permute.xlu0 %887
        %889 = vrot.lane.b32.xlu0 %v846, 124
        %v890 = vpop.permute.xlu0 %889
        %891 = vrot.lane.b32.xlu0 %v851, 124
        %v892 = vpop.permute.xlu0 %891
        %vm893 = vcmask 1014784
        %v894 = vsel %vm893, %v888, %v890
        %v895 = vsel %vm893, %v890, %v892
        %v898 = vsel %vm885, 0.25, %v894
        %v899 = vsel %vm886, 0.25, %v895
        %v900 = vlaneseq
        %v901 = vshrl.u32 %v900, 7
        %v902 = vsub.s32 0, %v901
        %v903 = vrot.slane %v877, %v902
        %v904 = vlaneseq
        %v905 = vshrl.u32 %v904, 7
        %v906 = vsub.s32 0, %v905
        %v907 = vrot.slane %v878, %v906
        %v908 = vmul.f32 %v903, %v898
        %v909 = vmul.f32 %v907, %v899
        %v910 = vlaneseq
        %v911 = vshrl.u32 %v910, 7
        %v912 = vsub.s32 1, %v911
        %v913 = vrot.slane %v877, %v912
        %v914 = vlaneseq
        %v915 = vshrl.u32 %v914, 7
        %v916 = vsub.s32 1, %v915
        %v917 = vrot.slane %v878, %v916
        %v918 = vmul.f32 %v913, %v898
        %v919 = vmul.f32 %v917, %v899
        %v920 = vlaneseq
        %v921 = vshrl.u32 %v920, 7
        %v922 = vsub.s32 2, %v921
        %v923 = vrot.slane %v877, %v922
        %v924 = vlaneseq
        %v925 = vshrl.u32 %v924, 7
        %v926 = vsub.s32 2, %v925
        %v927 = vrot.slane %v878, %v926
        %v928 = vmul.f32 %v923, %v898
        %v929 = vmul.f32 %v927, %v899
        %v930 = vlaneseq
        %v931 = vshrl.u32 %v930, 7
        %v932 = vsub.s32 3, %v931
        %v933 = vrot.slane %v877, %v932
        %v934 = vlaneseq
        %v935 = vshrl.u32 %v934, 7
        %v936 = vsub.s32 3, %v935
        %v937 = vrot.slane %v878, %v936
        %v938 = vmul.f32 %v933, %v898
        %v939 = vmul.f32 %v937, %v899
        %v942 = vrot.slane %v918, 4
        %v943 = vrot.slane %v919, 4
        %v948 = vrot.slane %v938, 4
        %v949 = vrot.slane %v939, 4
        %v952 = vsel %vm725, %v908, %v942
        %v953 = vsel %vm725, %v909, %v943
        %v954 = vsel %vm725, %v928, %v948
        %v955 = vsel %vm725, %v929, %v949
        %v956 = vlaneseq
        %v957 = vshrl.u32 %v956, 7
        %v958 = vsub.s32 0, %v957
        %v959 = vrot.slane %v850, %v958
        %v960 = vlaneseq
        %v961 = vshrl.u32 %v960, 7
        %v962 = vsub.s32 0, %v961
        %v963 = vrot.slane %v846, %v962
        %v964 = vlaneseq
        %v965 = vshrl.u32 %v964, 7
        %v966 = vsub.s32 0, %v965
        %v967 = vrot.slane %v851, %v966
        %968 = vrot.lane.b32.xlu0 %v837, 1
        %v969 = vpop.permute.xlu0 %968
        %970 = vrot.lane.b32.xlu0 %v840, 1
        %v971 = vpop.permute.xlu0 %970
        %vm972 = vcmask 7168
        %v973 = vsel %vm972, %v969, %v971
        %v977 = vmul.f32 %v959, %v969
        %v978 = vmul.f32 %v963, %v973
        %v979 = vmul.f32 %v967, %v971
        %v980 = vlaneseq
        %v981 = vshrl.u32 %v980, 7
        %v982 = vsub.s32 1, %v981
        %v983 = vrot.slane %v850, %v982
        %v984 = vlaneseq
        %v985 = vshrl.u32 %v984, 7
        %v986 = vsub.s32 1, %v985
        %v987 = vrot.slane %v846, %v986
        %v988 = vlaneseq
        %v989 = vshrl.u32 %v988, 7
        %v990 = vsub.s32 1, %v989
        %v991 = vrot.slane %v851, %v990
        %v992 = vmul.f32 %v983, %v969
        %v993 = vmul.f32 %v987, %v973
        %v994 = vmul.f32 %v991, %v971
        %v995 = vlaneseq
        %v996 = vshrl.u32 %v995, 7
        %v997 = vsub.s32 2, %v996
        %v998 = vrot.slane %v850, %v997
        %v999 = vlaneseq
        %v1000 = vshrl.u32 %v999, 7
        %v1001 = vsub.s32 2, %v1000
        %v1002 = vrot.slane %v846, %v1001
        %v1003 = vlaneseq
        %v1004 = vshrl.u32 %v1003, 7
        %v1005 = vsub.s32 2, %v1004
        %v1006 = vrot.slane %v851, %v1005
        %v1007 = vmul.f32 %v998, %v969
        %v1008 = vmul.f32 %v1002, %v973
        %v1009 = vmul.f32 %v1006, %v971
        %v1010 = vlaneseq
        %v1011 = vshrl.u32 %v1010, 7
        %v1012 = vsub.s32 3, %v1011
        %v1013 = vrot.slane %v850, %v1012
        %v1014 = vlaneseq
        %v1015 = vshrl.u32 %v1014, 7
        %v1016 = vsub.s32 3, %v1015
        %v1017 = vrot.slane %v846, %v1016
        %v1018 = vlaneseq
        %v1019 = vshrl.u32 %v1018, 7
        %v1020 = vsub.s32 3, %v1019
        %v1021 = vrot.slane %v851, %v1020
        %v1022 = vmul.f32 %v1013, %v969
        %v1023 = vmul.f32 %v1017, %v973
        %v1024 = vmul.f32 %v1021, %v971
        %v1028 = vrot.slane %v992, 4
        %v1029 = vrot.slane %v993, 4
        %v1030 = vrot.slane %v994, 4
        %v1037 = vrot.slane %v1022, 4
        %v1038 = vrot.slane %v1023, 4
        %v1039 = vrot.slane %v1024, 4
        %v1043 = vsel %vm725, %v977, %v1028
        %v1044 = vsel %vm725, %v978, %v1029
        %v1045 = vsel %vm725, %v979, %v1030
        %v1046 = vsel %vm725, %v1007, %v1037
        %v1047 = vsel %vm725, %v1008, %v1038
        %v1048 = vsel %vm725, %v1009, %v1039
        %v1049 = vlaneseq
        %v1050 = vshrl.u32 %v1049, 7
        %v1051 = vsub.s32 7, %v1050
        %v1052 = vrot.slane %v819, %v1051
        %v1053 = vlaneseq
        %v1054 = vshrl.u32 %v1053, 7
        %v1055 = vsub.s32 7, %v1054
        %v1056 = vrot.slane %v820, %v1055
        %v1057 = vmul.f32 %v1052, %v952
        %v1058 = vmul.f32 %v1056, %v953
        %v1059 = vmul.f32 %v1052, %v954
        %v1060 = vmul.f32 %v1056, %v955
        %v1061 = vlaneseq
        %v1062 = vshrl.u32 %v1061, 7
        %v1063 = vsub.s32 0, %v1062
        %v1064 = vrot.slane %v821, %v1063
        %v1065 = vlaneseq
        %v1066 = vshrl.u32 %v1065, 7
        %v1067 = vsub.s32 0, %v1066
        %v1068 = vrot.slane %v822, %v1067
        %v1069 = vmul.f32 %v1064, %v952
        %v1070 = vmul.f32 %v1068, %v953
        %v1071 = vmul.f32 %v1064, %v954
        %v1072 = vmul.f32 %v1068, %v955
        %v1073 = vlaneseq
        %v1074 = vshrl.u32 %v1073, 7
        %v1075 = vsub.s32 1, %v1074
        %v1076 = vrot.slane %v821, %v1075
        %v1077 = vlaneseq
        %v1078 = vshrl.u32 %v1077, 7
        %v1079 = vsub.s32 1, %v1078
        %v1080 = vrot.slane %v822, %v1079
        %v1081 = vmul.f32 %v1076, %v952
        %v1082 = vmul.f32 %v1080, %v953
        %v1083 = vmul.f32 %v1076, %v954
        %v1084 = vmul.f32 %v1080, %v955
        %v1085 = vlaneseq
        %v1086 = vshrl.u32 %v1085, 7
        %v1087 = vsub.s32 2, %v1086
        %v1088 = vrot.slane %v821, %v1087
        %v1089 = vlaneseq
        %v1090 = vshrl.u32 %v1089, 7
        %v1091 = vsub.s32 2, %v1090
        %v1092 = vrot.slane %v822, %v1091
        %v1093 = vmul.f32 %v1088, %v952
        %v1094 = vmul.f32 %v1092, %v953
        %v1095 = vmul.f32 %v1088, %v954
        %v1096 = vmul.f32 %v1092, %v955
        %1103 = vrot.lane.b32.xlu0 %v1043, 127
        %v1104 = vpop.permute.xlu0 %1103
        %1105 = vrot.lane.b32.xlu0 %v1044, 127
        %v1106 = vpop.permute.xlu0 %1105
        %1107 = vrot.lane.b32.xlu0 %v1045, 127
        %v1108 = vpop.permute.xlu0 %1107
        %1109 = vrot.lane.b32.xlu0 %v1046, 127
        %v1110 = vpop.permute.xlu0 %1109
        %1111 = vrot.lane.b32.xlu0 %v1047, 127
        %v1112 = vpop.permute.xlu0 %1111
        %1113 = vrot.lane.b32.xlu0 %v1048, 127
        %v1114 = vpop.permute.xlu0 %1113
        %vm1115 = vcmask 1039360
        %v1116 = vsel %vm1115, %v1104, %v1106
        %v1117 = vsel %vm1115, %v1106, %v1108
        %v1118 = vsel %vm1115, %v1110, %v1112
        %v1119 = vsel %vm1115, %v1112, %v1114
        %v1124 = vmul.f32 %v959, %v1116
        %v1125 = vmul.f32 %v963, %v1117
        %v1126 = vmul.f32 %v959, %v1118
        %v1127 = vmul.f32 %v963, %v1119
        %v1128 = vmul.f32 %v983, %v1116
        %v1129 = vmul.f32 %v987, %v1117
        %v1130 = vmul.f32 %v983, %v1118
        %v1131 = vmul.f32 %v987, %v1119
        %v1132 = vmul.f32 %v998, %v1116
        %v1133 = vmul.f32 %v1002, %v1117
        %v1134 = vmul.f32 %v998, %v1118
        %v1135 = vmul.f32 %v1002, %v1119
        %v1136 = vmul.f32 %v1013, %v1116
        %v1137 = vmul.f32 %v1017, %v1117
        %v1138 = vmul.f32 %v1013, %v1118
        %v1139 = vmul.f32 %v1017, %v1119
        %v1140 = vld [vmem:[%s3] sm:$0xff]
        %v1141 = vld [vmem:[%s3 + $0x8] sm:$0xff]
        %v1142 = vld [vmem:[%s3 + $0x10] sm:$0xff]
        %v1143 = vld [vmem:[%s3 + $0x18] sm:$0xff]
        %1144 = vmatprep.subr.mxu0 %v1058
        %1145 = vmatpush1.msra.mxu0 %v1057
        %1146 = vmatprep.subr.mxu0 %v1060
        %1147 = vmatpush1.msra.mxu0 %v1059
        %1148 = vmatprep.subr.mxu0 %v1070
        %1149 = vmatpush1.msra.mxu0 %v1069
        %1150 = vmatprep.subr.mxu0 %v1072
        %1151 = vmatpush1.msra.mxu0 %v1071
        %1152 = vmatprep.subr.mxu0 %v1082
        %1153 = vmatpush1.msra.mxu0 %v1081
        %1154 = vmatprep.subr.mxu0 %v1084
        %1155 = vmatpush1.msra.mxu0 %v1083
        %1156 = vmatprep.subr.mxu0 %v1094
        %1157 = vmatpush1.msra.mxu0 %v1093
        %1158 = vmatprep.subr.mxu0 %v1096
        %1159 = vmatpush1.msra.mxu0 %v1095
        %1160 = vmatprep.subr.mxu0 %v1125
        %1161 = vmatpush1.msra.mxu0 %v1124
        %1162 = vmatprep.subr.mxu0 %v1127
        %1163 = vmatpush1.msra.mxu0 %v1126
        %1164 = vmatprep.subr.mxu0 %v1129
        %1165 = vmatpush1.msra.mxu0 %v1128
        %1166 = vmatprep.subr.mxu0 %v1131
        %1167 = vmatpush1.msra.mxu0 %v1130
        %1168 = vmatprep.subr.mxu0 %v1133
        %1169 = vmatpush1.msra.mxu0 %v1132
        %1170 = vmatprep.subr.mxu0 %v1135
        %1171 = vmatpush1.msra.mxu0 %v1134
        %1172 = vmatprep.subr.mxu0 %v1137
        %1173 = vmatpush1.msra.mxu0 %v1136
        %1174 = vmatprep.subr.mxu0 %v1139
        %1175 = vmatpush1.msra.mxu0 %v1138
        %1176 = vmatprep.subr.mxu0 0.0
        %1177 = vmatpush1.msra.mxu0 0.0
        %1178 = vmatprep.subr.mxu0 0.0
        %1179 = vmatpush1.msra.mxu0 0.0
        %1180 = vmatprep.subr.mxu0 0.0
        %1181 = vmatpush1.msra.mxu0 0.0
        %1182 = vmatprep.subr.mxu0 0.0
        %1183 = vmatpush1.msra.mxu0 0.0
        %1184 = vmatprep.subr.mxu0 0.0
        %1185 = vmatpush1.msra.mxu0 0.0
        %1186 = vmatprep.subr.mxu0 0.0
        %1187 = vmatpush1.msra.mxu0 0.0
        %1188 = vmatprep.subr.mxu0 0.0
        %1189 = vmatpush1.msra.mxu0 0.0
        %1190 = vmatprep.subr.mxu0 0.0
        %1191 = vmatpush1.msra.mxu0 0.0
        %1192 = vmatprep.subr.mxu0 0.0
        %1193 = vmatpush1.msra.mxu0 0.0
        %1194 = vmatprep.subr.mxu0 0.0
        %1195 = vmatpush1.msra.mxu0 0.0
        %1196 = vmatprep.subr.mxu0 0.0
        %1197 = vmatpush1.msra.mxu0 0.0
        %1198 = vmatprep.subr.mxu0 0.0
        %1199 = vmatpush1.msra.mxu0 0.0
        %1200 = vmatprep.subr.mxu0 0.0
        %1201 = vmatpush1.msra.mxu0 0.0
        %1202 = vmatprep.subr.mxu0 0.0
        %1203 = vmatpush1.msra.mxu0 0.0
        %1204 = vmatprep.subr.mxu0 0.0
        %1205 = vmatpush1.msra.mxu0 0.0
        %1206 = vmatprep.subr.mxu0 0.0
        %1207 = vmatpush1.msra.mxu0 0.0
        %1208 = vmatprep.mubr.f32.mxu0 0.0
        %1209 = vmatmul.mubr.f32.gmra.mrb[0].mxu0 %v1140
        %v1210 = vpop.f32.mrb[0].mxu0
        %v1211 = vadd.f32 0.0, %v1210
        %v1212 = vpop.f32.mrb[0].mxu0
        %v1213 = vadd.f32 0.0, %v1212
        %1214 = vmatprep.mubr.f32.mxu0 0.0
        %1215 = vmatmul.mubr.f32.gmra.mrb[0].mxu0 %v1141
        %v1216 = vpop.f32.mrb[0].mxu0
        %v1217 = vadd.f32 0.0, %v1216
        %v1218 = vpop.f32.mrb[0].mxu0
        %v1219 = vadd.f32 0.0, %v1218
        %1220 = vmatprep.mubr.f32.mxu0 0.0
        %1221 = vmatmul.mubr.f32.gmra.mrb[0].mxu0 %v1142
        %v1222 = vpop.f32.mrb[0].mxu0
        %v1223 = vadd.f32 0.0, %v1222
        %v1224 = vpop.f32.mrb[0].mxu0
        %v1225 = vadd.f32 0.0, %v1224
        %1226 = vmatprep.mubr.f32.mxu0 0.0
        %1227 = vmatmul.mubr.f32.gmra.mrb[0].mxu0 %v1143
        %v1228 = vpop.f32.mrb[0].mxu0
        %v1229 = vadd.f32 0.0, %v1228
        %v1230 = vpop.f32.mrb[0].mxu0
        %v1231 = vadd.f32 0.0, %v1230
        %1232 = vdwg.mxu0
        %v1233 = vmul.f32 %v799, %v1211
        %v1234 = vmul.f32 %v801, %v1213
        %v1235 = vmul.f32 %v805, %v1217
        %v1236 = vmul.f32 %v807, %v1219
        %v1237 = vmul.f32 %v1233, %v1223
        %v1238 = vmul.f32 %v1234, %v1225
        %v1239 = vmul.f32 %v1235, %v1229
        %v1240 = vmul.f32 %v1236, %v1231
        %1241 = vst [vmem:[%s691] sm:$0xff] %v1237
        %1242 = vst [vmem:[%s691 + $0x8] sm:$0xff] %v1238
        %1243 = vst [vmem:[%s691 + $0x10] sm:$0x7f] %v1239
        %1244 = vst [vmem:[%s691 + $0x18] sm:$0x7f] %v1240
        %s1245 = sand.u32 %s135, 1
        %s1246 = sand.u32 %s135, 1
        %s1247 = smul.addr %s1246, 32
        %s1248 = scalar_lea.vmem [#allocation3], %s1247
        // Predicated region
        $region103: #{tpu_custom_call.1} parent=97 // pred_check
          %p1249 = pneg %p145
        $region104: #{tpu_custom_call.1} parent=97 // pred_check_branch
          %1251 = sbr.rel (%p1249) target = $region106
        $region105: #{tpu_custom_call.1} parent=97 // pred_region
          %s1252 = smul.u32 2, %s20
          %s1253 = ssub.s32 7, %s1252
          %p1254 = scmp.lt.s32.totalorder %s1253, 2
          %s1255 = scalar_select %p1254, %s1253, 2
          %s1256 = smul.u32 256, %s1255
          %p1257 = scmp.ne.s32.totalorder 0, %s1256
          %s1258 = smul.addr %s19, 14
          %s1259 = sadd.s32 %s1252, %s1258
          %s1260 = smul.addr %s1259, 8
          %s1261 = scalar_lea.vmem %s4, %s1260
          %s1262 = smul.u32 %s1255, 8
          // Predicated region
          $region107: #{tpu_custom_call.1} parent=105 // pred_check
            %p1263 = pneg %p1257
          $region108: #{tpu_custom_call.1} parent=105 // pred_check_branch
            %1265 = sbr.rel (%p1263) target = $region110
          $region109: #{tpu_custom_call.1} parent=105 // pred_region
            %p1266 = scmp.lt.u32.totalorder %s1262, 8
            %p1267 = pneg %p1266
            // Predicated region
            $region111: #{tpu_custom_call.1} parent=109 // pred_check
              _
            $region112: #{tpu_custom_call.1} parent=109 // pred_check_branch
              %1269 = sbr.rel (%p1266) target = $region114
            $region113: #{tpu_custom_call.1} parent=109 // pred_region
              %s1286 = sand.u32 %s1262, 7
              %p1287 = scmp.eq.s32.totalorder %s1286, 0
              // Predicated region
              $region126: #{tpu_custom_call.1} parent=113 // pred_check
                %p1288 = pneg %p1287
              $region127: #{tpu_custom_call.1} parent=113 // pred_check_branch
                %1290 = sbr.rel (%p1288) target = $region129
              $region128: #{tpu_custom_call.1} parent=113 // pred_region
                %s1291 = sshrl.u32 %s1262, 3
                %s1292 = sshrl.u32 %s1291, 5
                // While loop
                $region130: #{tpu_custom_call.1} parent=128 // loop_pre_header
                  _
                $region131: #{tpu_custom_call.1} parent=128 // loop_header
                  %s1296 = sphi 0, %s1298
                  %p1297 = scmp.ge.s32.totalorder %s1296, %s1292
                  %s1301 = sphi 0, %s1434
                  %s1302 = sphi %s1248, %s1437
                  %s1303 = sphi %s1261, %s1438
                $region132: #{tpu_custom_call.1} parent=128 // loop_header_branch
                  %1300 = sbr.rel (%p1297) target = $region136
                $region133: #{tpu_custom_call.1} parent=128 // loop_body
                  %v1304 = vld [vmem:[%s1302] sm:$0xff]
                  %1305 = vst [vmem:[%s1303] sm:$0xff] %v1304
                  %v1306 = vld [vmem:[%s1302 + $0x8] sm:$0xff]
                  %1307 = vst [vmem:[%s1303 + $0x8] sm:$0xff] %v1306
                  %v1308 = vld [vmem:[%s1302 + $0x10] sm:$0xff]
                  %1309 = vst [vmem:[%s1303 + $0x10] sm:$0xff] %v1308
                  %v1310 = vld [vmem:[%s1302 + $0x18] sm:$0xff]
                  %1311 = vst [vmem:[%s1303 + $0x18] sm:$0xff] %v1310
                  %v1312 = vld [vmem:[%s1302 + $0x20] sm:$0xff]
                  %1313 = vst [vmem:[%s1303 + $0x20] sm:$0xff] %v1312
                  %v1314 = vld [vmem:[%s1302 + $0x28] sm:$0xff]
                  %1315 = vst [vmem:[%s1303 + $0x28] sm:$0xff] %v1314
                  %v1316 = vld [vmem:[%s1302 + $0x30] sm:$0xff]
                  %1317 = vst [vmem:[%s1303 + $0x30] sm:$0xff] %v1316
                  %v1318 = vld [vmem:[%s1302 + $0x38] sm:$0xff]
                  %1319 = vst [vmem:[%s1303 + $0x38] sm:$0xff] %v1318
                  %v1320 = vld [vmem:[%s1302 + $0x40] sm:$0xff]
                  %1321 = vst [vmem:[%s1303 + $0x40] sm:$0xff] %v1320
                  %v1322 = vld [vmem:[%s1302 + $0x48] sm:$0xff]
                  %1323 = vst [vmem:[%s1303 + $0x48] sm:$0xff] %v1322
                  %v1324 = vld [vmem:[%s1302 + $0x50] sm:$0xff]
                  %1325 = vst [vmem:[%s1303 + $0x50] sm:$0xff] %v1324
                  %v1326 = vld [vmem:[%s1302 + $0x58] sm:$0xff]
                  %1327 = vst [vmem:[%s1303 + $0x58] sm:$0xff] %v1326
                  %v1328 = vld [vmem:[%s1302 + $0x60] sm:$0xff]
                  %1329 = vst [vmem:[%s1303 + $0x60] sm:$0xff] %v1328
                  %v1330 = vld [vmem:[%s1302 + $0x68] sm:$0xff]
                  %1331 = vst [vmem:[%s1303 + $0x68] sm:$0xff] %v1330
                  %v1332 = vld [vmem:[%s1302 + $0x70] sm:$0xff]
                  %1333 = vst [vmem:[%s1303 + $0x70] sm:$0xff] %v1332
                  %v1334 = vld [vmem:[%s1302 + $0x78] sm:$0xff]
                  %1335 = vst [vmem:[%s1303 + $0x78] sm:$0xff] %v1334
                  %v1336 = vld [vmem:[%s1302 + $0x80] sm:$0xff]
                  %1337 = vst [vmem:[%s1303 + $0x80] sm:$0xff] %v1336
                  %v1338 = vld [vmem:[%s1302 + $0x88] sm:$0xff]
                  %1339 = vst [vmem:[%s1303 + $0x88] sm:$0xff] %v1338
                  %v1340 = vld [vmem:[%s1302 + $0x90] sm:$0xff]
                  %1341 = vst [vmem:[%s1303 + $0x90] sm:$0xff] %v1340
                  %v1342 = vld [vmem:[%s1302 + $0x98] sm:$0xff]
                  %1343 = vst [vmem:[%s1303 + $0x98] sm:$0xff] %v1342
                  %v1344 = vld [vmem:[%s1302 + $0xa0] sm:$0xff]
                  %1345 = vst [vmem:[%s1303 + $0xa0] sm:$0xff] %v1344
                  %v1346 = vld [vmem:[%s1302 + $0xa8] sm:$0xff]
                  %1347 = vst [vmem:[%s1303 + $0xa8] sm:$0xff] %v1346
                  %v1348 = vld [vmem:[%s1302 + $0xb0] sm:$0xff]
                  %1349 = vst [vmem:[%s1303 + $0xb0] sm:$0xff] %v1348
                  %v1350 = vld [vmem:[%s1302 + $0xb8] sm:$0xff]
                  %1351 = vst [vmem:[%s1303 + $0xb8] sm:$0xff] %v1350
                  %v1352 = vld [vmem:[%s1302 + $0xc0] sm:$0xff]
                  %1353 = vst [vmem:[%s1303 + $0xc0] sm:$0xff] %v1352
                  %v1354 = vld [vmem:[%s1302 + $0xc8] sm:$0xff]
                  %1355 = vst [vmem:[%s1303 + $0xc8] sm:$0xff] %v1354
                  %v1356 = vld [vmem:[%s1302 + $0xd0] sm:$0xff]
                  %1357 = vst [vmem:[%s1303 + $0xd0] sm:$0xff] %v1356
                  %v1358 = vld [vmem:[%s1302 + $0xd8] sm:$0xff]
                  %1359 = vst [vmem:[%s1303 + $0xd8] sm:$0xff] %v1358
                  %v1360 = vld [vmem:[%s1302 + $0xe0] sm:$0xff]
                  %1361 = vst [vmem:[%s1303 + $0xe0] sm:$0xff] %v1360
                  %v1362 = vld [vmem:[%s1302 + $0xe8] sm:$0xff]
                  %1363 = vst [vmem:[%s1303 + $0xe8] sm:$0xff] %v1362
                  %v1364 = vld [vmem:[%s1302 + $0xf0] sm:$0xff]
                  %1365 = vst [vmem:[%s1303 + $0xf0] sm:$0xff] %v1364
                  %v1366 = vld [vmem:[%s1302 + $0xf8] sm:$0xff]
                  %1367 = vst [vmem:[%s1303 + $0xf8] sm:$0xff] %v1366
                  %v1368 = vld [vmem:[%s1302 + $0x10] sm:$0xff]
                  %1369 = vst [vmem:[%s1303 + $0x38] sm:$0xff] %v1368
                  %v1370 = vld [vmem:[%s1302 + $0x18] sm:$0xff]
                  %1371 = vst [vmem:[%s1303 + $0x40] sm:$0xff] %v1370
                  %v1372 = vld [vmem:[%s1302 + $0x20] sm:$0xff]
                  %1373 = vst [vmem:[%s1303 + $0x48] sm:$0xff] %v1372
                  %v1374 = vld [vmem:[%s1302 + $0x28] sm:$0xff]
                  %1375 = vst [vmem:[%s1303 + $0x50] sm:$0xff] %v1374
                  %v1376 = vld [vmem:[%s1302 + $0x30] sm:$0xff]
                  %1377 = vst [vmem:[%s1303 + $0x58] sm:$0xff] %v1376
                  %v1378 = vld [vmem:[%s1302 + $0x38] sm:$0xff]
                  %1379 = vst [vmem:[%s1303 + $0x60] sm:$0xff] %v1378
                  %v1380 = vld [vmem:[%s1302 + $0x40] sm:$0xff]
                  %1381 = vst [vmem:[%s1303 + $0x68] sm:$0xff] %v1380
                  %v1382 = vld [vmem:[%s1302 + $0x48] sm:$0xff]
                  %1383 = vst [vmem:[%s1303 + $0x70] sm:$0xff] %v1382
                  %v1384 = vld [vmem:[%s1302 + $0x50] sm:$0xff]
                  %1385 = vst [vmem:[%s1303 + $0x78] sm:$0xff] %v1384
                  %v1386 = vld [vmem:[%s1302 + $0x58] sm:$0xff]
                  %1387 = vst [vmem:[%s1303 + $0x80] sm:$0xff] %v1386
                  %v1388 = vld [vmem:[%s1302 + $0x60] sm:$0xff]
                  %1389 = vst [vmem:[%s1303 + $0x88] sm:$0xff] %v1388
                  %v1390 = vld [vmem:[%s1302 + $0x68] sm:$0xff]
                  %1391 = vst [vmem:[%s1303 + $0x90] sm:$0xff] %v1390
                  %v1392 = vld [vmem:[%s1302 + $0x70] sm:$0xff]
                  %1393 = vst [vmem:[%s1303 + $0x98] sm:$0xff] %v1392
                  %v1394 = vld [vmem:[%s1302 + $0x78] sm:$0xff]
                  %1395 = vst [vmem:[%s1303 + $0xa0] sm:$0xff] %v1394
                  %v1396 = vld [vmem:[%s1302 + $0x80] sm:$0xff]
                  %1397 = vst [vmem:[%s1303 + $0xa8] sm:$0xff] %v1396
                  %v1398 = vld [vmem:[%s1302 + $0x88] sm:$0xff]
                  %1399 = vst [vmem:[%s1303 + $0xb0] sm:$0xff] %v1398
                  %v1400 = vld [vmem:[%s1302 + $0x90] sm:$0xff]
                  %1401 = vst [vmem:[%s1303 + $0xb8] sm:$0xff] %v1400
                  %v1402 = vld [vmem:[%s1302 + $0x98] sm:$0xff]
                  %1403 = vst [vmem:[%s1303 + $0xc0] sm:$0xff] %v1402
                  %v1404 = vld [vmem:[%s1302 + $0xa0] sm:$0xff]
                  %1405 = vst [vmem:[%s1303 + $0xc8] sm:$0xff] %v1404
                  %v1406 = vld [vmem:[%s1302 + $0xa8] sm:$0xff]
                  %1407 = vst [vmem:[%s1303 + $0xd0] sm:$0xff] %v1406
                  %v1408 = vld [vmem:[%s1302 + $0xb0] sm:$0xff]
                  %1409 = vst [vmem:[%s1303 + $0xd8] sm:$0xff] %v1408
                  %v1410 = vld [vmem:[%s1302 + $0xb8] sm:$0xff]
                  %1411 = vst [vmem:[%s1303 + $0xe0] sm:$0xff] %v1410
                  %v1412 = vld [vmem:[%s1302 + $0xc0] sm:$0xff]
                  %1413 = vst [vmem:[%s1303 + $0xe8] sm:$0xff] %v1412
                  %v1414 = vld [vmem:[%s1302 + $0xc8] sm:$0xff]
                  %1415 = vst [vmem:[%s1303 + $0xf0] sm:$0xff] %v1414
                  %v1416 = vld [vmem:[%s1302 + $0xd0] sm:$0xff]
                  %1417 = vst [vmem:[%s1303 + $0xf8] sm:$0xff] %v1416
                  %v1418 = vld [vmem:[%s1302 + $0xd8] sm:$0xff]
                  %1419 = vst [vmem:[%s1303 + $0x100] sm:$0xff] %v1418
                  %v1420 = vld [vmem:[%s1302 + $0xe0] sm:$0xff]
                  %1421 = vst [vmem:[%s1303 + $0x108] sm:$0xff] %v1420
                  %v1422 = vld [vmem:[%s1302 + $0xe8] sm:$0xff]
                  %1423 = vst [vmem:[%s1303 + $0x110] sm:$0xff] %v1422
                  %v1424 = vld [vmem:[%s1302 + $0xf0] sm:$0xff]
                  %1425 = vst [vmem:[%s1303 + $0x118] sm:$0xff] %v1424
                  %v1426 = vld [vmem:[%s1302 + $0xf8] sm:$0xff]
                  %1427 = vst [vmem:[%s1303 + $0x120] sm:$0xff] %v1426
                  %v1428 = vld [vmem:[%s1302 + $0x100] sm:$0xff]
                  %1429 = vst [vmem:[%s1303 + $0x128] sm:$0xff] %v1428
                  %v1430 = vld [vmem:[%s1302 + $0x108] sm:$0xff]
                  %1431 = vst [vmem:[%s1303 + $0x130] sm:$0xff] %v1430
                  %s1432 = sadd.s32 1, %s1301
                  %p1433 = scmp.ge.s32.totalorder %s1432, %s1292
                  %s1434 = scalar_select %p1433, 0, %s1432
                  %s1435 = smul.u32 %s1434, 256
                  %s1436 = smul.u32 %s1434, 256
                  %s1437 = scalar_lea.vmem %s1248, %s1435 [#allocation3]
                  %s1438 = scalar_lea.vmem %s1261, %s1436
                $region134: #{tpu_custom_call.1} parent=128 // loop_footer
                  %s1298 = sadd.s32 %s1296, 1
                $region135: #{tpu_custom_call.1} parent=128 // loop_footer_branch
                  %1295 = sbr.rel target = $region131
                $region136: #{tpu_custom_call.1} parent=128 // loop_exit
                  _
                %s1439 = sshrl.u32 %s1291, 5
                %s1440 = sand.u32 %s1291, 31
                %s1441 = smul.u32 %s1439, 32
                %s1442 = smul.u32 128, %s1441
                %s1443 = sshra.s32 %s1442, 4
                %s1444 = scalar_lea.vmem %s1248, %s1443 [#allocation3]
                %s1445 = smul.u32 128, %s1441
                %s1446 = sshra.s32 %s1445, 4
                %s1447 = scalar_lea.vmem %s1261, %s1446
                // While loop
                $region137: #{tpu_custom_call.1} parent=128 // loop_pre_header
                  _
                $region138: #{tpu_custom_call.1} parent=128 // loop_header
                  %s1451 = sphi 0, %s1453
                  %p1452 = scmp.ge.s32.totalorder %s1451, %s1440
                  %s1456 = sphi 0, %s1465
                  %s1457 = sphi %s1444, %s1468
                  %s1458 = sphi %s1447, %s1469
                $region139: #{tpu_custom_call.1} parent=128 // loop_header_branch
                  %1455 = sbr.rel (%p1452) target = $region143
                $region140: #{tpu_custom_call.1} parent=128 // loop_body
                  %v1459 = vld [vmem:[%s1457] sm:$0xff]
                  %1460 = vst [vmem:[%s1458] sm:$0xff] %v1459
                  %v1461 = vld [vmem:[%s1457 + $0x10] sm:$0xff]
                  %1462 = vst [vmem:[%s1458 + $0x38] sm:$0xff] %v1461
                  %s1463 = sadd.s32 1, %s1456
                  %p1464 = scmp.ge.s32.totalorder %s1463, %s1440
                  %s1465 = scalar_select %p1464, 0, %s1463
                  %s1466 = smul.u32 %s1465, 8
                  %s1467 = smul.u32 %s1465, 8
                  %s1468 = scalar_lea.vmem %s1444, %s1466 [#allocation3]
                  %s1469 = scalar_lea.vmem %s1447, %s1467
                $region141: #{tpu_custom_call.1} parent=128 // loop_footer
                  %s1453 = sadd.s32 %s1451, 1
                $region142: #{tpu_custom_call.1} parent=128 // loop_footer_branch
                  %1450 = sbr.rel target = $region138
                $region143: #{tpu_custom_call.1} parent=128 // loop_exit
                  _
              $region129: #{tpu_custom_call.1} parent=113 // pred_fallthru
                _
              %p1470 = pneg %p1287
              // Predicated region
              $region144: #{tpu_custom_call.1} parent=113 // pred_check
                _
              $region145: #{tpu_custom_call.1} parent=113 // pred_check_branch
                %1472 = sbr.rel (%p1287) target = $region147
              $region146: #{tpu_custom_call.1} parent=113 // pred_region
                %s1473 = sand.u32 %s1262, 7
                %s1474 = ssub.s32 %s1262, %s1473
                %s1475 = scalar_lea.vmem %s1248, %s1474 [#allocation3]
                %s1476 = ssub.s32 %s1262, %s1473
                %s1477 = scalar_lea.vmem %s1261, %s1476
                %s1478 = sshrl.u32 %s1262, 3
                %s1479 = sshrl.u32 %s1478, 5
                // While loop
                $region148: #{tpu_custom_call.1} parent=146 // loop_pre_header
                  _
                $region149: #{tpu_custom_call.1} parent=146 // loop_header
                  %s1483 = sphi 0, %s1485
                  %p1484 = scmp.ge.s32.totalorder %s1483, %s1479
                  %s1488 = sphi 0, %s1621
                  %s1489 = sphi %s1248, %s1624
                  %s1490 = sphi %s1261, %s1625
                $region150: #{tpu_custom_call.1} parent=146 // loop_header_branch
                  %1487 = sbr.rel (%p1484) target = $region154
                $region151: #{tpu_custom_call.1} parent=146 // loop_body
                  %v1491 = vld [vmem:[%s1489] sm:$0xff]
                  %1492 = vst [vmem:[%s1490] sm:$0xff] %v1491
                  %v1493 = vld [vmem:[%s1489 + $0x8] sm:$0xff]
                  %1494 = vst [vmem:[%s1490 + $0x8] sm:$0xff] %v1493
                  %v1495 = vld [vmem:[%s1489 + $0x10] sm:$0xff]
                  %1496 = vst [vmem:[%s1490 + $0x10] sm:$0xff] %v1495
                  %v1497 = vld [vmem:[%s1489 + $0x18] sm:$0xff]
                  %1498 = vst [vmem:[%s1490 + $0x18] sm:$0xff] %v1497
                  %v1499 = vld [vmem:[%s1489 + $0x20] sm:$0xff]
                  %1500 = vst [vmem:[%s1490 + $0x20] sm:$0xff] %v1499
                  %v1501 = vld [vmem:[%s1489 + $0x28] sm:$0xff]
                  %1502 = vst [vmem:[%s1490 + $0x28] sm:$0xff] %v1501
                  %v1503 = vld [vmem:[%s1489 + $0x30] sm:$0xff]
                  %1504 = vst [vmem:[%s1490 + $0x30] sm:$0xff] %v1503
                  %v1505 = vld [vmem:[%s1489 + $0x38] sm:$0xff]
                  %1506 = vst [vmem:[%s1490 + $0x38] sm:$0xff] %v1505
                  %v1507 = vld [vmem:[%s1489 + $0x40] sm:$0xff]
                  %1508 = vst [vmem:[%s1490 + $0x40] sm:$0xff] %v1507
                  %v1509 = vld [vmem:[%s1489 + $0x48] sm:$0xff]
                  %1510 = vst [vmem:[%s1490 + $0x48] sm:$0xff] %v1509
                  %v1511 = vld [vmem:[%s1489 + $0x50] sm:$0xff]
                  %1512 = vst [vmem:[%s1490 + $0x50] sm:$0xff] %v1511
                  %v1513 = vld [vmem:[%s1489 + $0x58] sm:$0xff]
                  %1514 = vst [vmem:[%s1490 + $0x58] sm:$0xff] %v1513
                  %v1515 = vld [vmem:[%s1489 + $0x60] sm:$0xff]
                  %1516 = vst [vmem:[%s1490 + $0x60] sm:$0xff] %v1515
                  %v1517 = vld [vmem:[%s1489 + $0x68] sm:$0xff]
                  %1518 = vst [vmem:[%s1490 + $0x68] sm:$0xff] %v1517
                  %v1519 = vld [vmem:[%s1489 + $0x70] sm:$0xff]
                  %1520 = vst [vmem:[%s1490 + $0x70] sm:$0xff] %v1519
                  %v1521 = vld [vmem:[%s1489 + $0x78] sm:$0xff]
                  %1522 = vst [vmem:[%s1490 + $0x78] sm:$0xff] %v1521
                  %v1523 = vld [vmem:[%s1489 + $0x80] sm:$0xff]
                  %1524 = vst [vmem:[%s1490 + $0x80] sm:$0xff] %v1523
                  %v1525 = vld [vmem:[%s1489 + $0x88] sm:$0xff]
                  %1526 = vst [vmem:[%s1490 + $0x88] sm:$0xff] %v1525
                  %v1527 = vld [vmem:[%s1489 + $0x90] sm:$0xff]
                  %1528 = vst [vmem:[%s1490 + $0x90] sm:$0xff] %v1527
                  %v1529 = vld [vmem:[%s1489 + $0x98] sm:$0xff]
                  %1530 = vst [vmem:[%s1490 + $0x98] sm:$0xff] %v1529
                  %v1531 = vld [vmem:[%s1489 + $0xa0] sm:$0xff]
                  %1532 = vst [vmem:[%s1490 + $0xa0] sm:$0xff] %v1531
                  %v1533 = vld [vmem:[%s1489 + $0xa8] sm:$0xff]
                  %1534 = vst [vmem:[%s1490 + $0xa8] sm:$0xff] %v1533
                  %v1535 = vld [vmem:[%s1489 + $0xb0] sm:$0xff]
                  %1536 = vst [vmem:[%s1490 + $0xb0] sm:$0xff] %v1535
                  %v1537 = vld [vmem:[%s1489 + $0xb8] sm:$0xff]
                  %1538 = vst [vmem:[%s1490 + $0xb8] sm:$0xff] %v1537
                  %v1539 = vld [vmem:[%s1489 + $0xc0] sm:$0xff]
                  %1540 = vst [vmem:[%s1490 + $0xc0] sm:$0xff] %v1539
                  %v1541 = vld [vmem:[%s1489 + $0xc8] sm:$0xff]
                  %1542 = vst [vmem:[%s1490 + $0xc8] sm:$0xff] %v1541
                  %v1543 = vld [vmem:[%s1489 + $0xd0] sm:$0xff]
                  %1544 = vst [vmem:[%s1490 + $0xd0] sm:$0xff] %v1543
                  %v1545 = vld [vmem:[%s1489 + $0xd8] sm:$0xff]
                  %1546 = vst [vmem:[%s1490 + $0xd8] sm:$0xff] %v1545
                  %v1547 = vld [vmem:[%s1489 + $0xe0] sm:$0xff]
                  %1548 = vst [vmem:[%s1490 + $0xe0] sm:$0xff] %v1547
                  %v1549 = vld [vmem:[%s1489 + $0xe8] sm:$0xff]
                  %1550 = vst [vmem:[%s1490 + $0xe8] sm:$0xff] %v1549
                  %v1551 = vld [vmem:[%s1489 + $0xf0] sm:$0xff]
                  %1552 = vst [vmem:[%s1490 + $0xf0] sm:$0xff] %v1551
                  %v1553 = vld [vmem:[%s1489 + $0xf8] sm:$0xff]
                  %1554 = vst [vmem:[%s1490 + $0xf8] sm:$0xff] %v1553
                  %v1555 = vld [vmem:[%s1489 + $0x10] sm:$0xff]
                  %1556 = vst [vmem:[%s1490 + $0x38] sm:$0xff] %v1555
                  %v1557 = vld [vmem:[%s1489 + $0x18] sm:$0xff]
                  %1558 = vst [vmem:[%s1490 + $0x40] sm:$0xff] %v1557
                  %v1559 = vld [vmem:[%s1489 + $0x20] sm:$0xff]
                  %1560 = vst [vmem:[%s1490 + $0x48] sm:$0xff] %v1559
                  %v1561 = vld [vmem:[%s1489 + $0x28] sm:$0xff]
                  %1562 = vst [vmem:[%s1490 + $0x50] sm:$0xff] %v1561
                  %v1563 = vld [vmem:[%s1489 + $0x30] sm:$0xff]
                  %1564 = vst [vmem:[%s1490 + $0x58] sm:$0xff] %v1563
                  %v1565 = vld [vmem:[%s1489 + $0x38] sm:$0xff]
                  %1566 = vst [vmem:[%s1490 + $0x60] sm:$0xff] %v1565
                  %v1567 = vld [vmem:[%s1489 + $0x40] sm:$0xff]
                  %1568 = vst [vmem:[%s1490 + $0x68] sm:$0xff] %v1567
                  %v1569 = vld [vmem:[%s1489 + $0x48] sm:$0xff]
                  %1570 = vst [vmem:[%s1490 + $0x70] sm:$0xff] %v1569
                  %v1571 = vld [vmem:[%s1489 + $0x50] sm:$0xff]
                  %1572 = vst [vmem:[%s1490 + $0x78] sm:$0xff] %v1571
                  %v1573 = vld [vmem:[%s1489 + $0x58] sm:$0xff]
                  %1574 = vst [vmem:[%s1490 + $0x80] sm:$0xff] %v1573
                  %v1575 = vld [vmem:[%s1489 + $0x60] sm:$0xff]
                  %1576 = vst [vmem:[%s1490 + $0x88] sm:$0xff] %v1575
                  %v1577 = vld [vmem:[%s1489 + $0x68] sm:$0xff]
                  %1578 = vst [vmem:[%s1490 + $0x90] sm:$0xff] %v1577
                  %v1579 = vld [vmem:[%s1489 + $0x70] sm:$0xff]
                  %1580 = vst [vmem:[%s1490 + $0x98] sm:$0xff] %v1579
                  %v1581 = vld [vmem:[%s1489 + $0x78] sm:$0xff]
                  %1582 = vst [vmem:[%s1490 + $0xa0] sm:$0xff] %v1581
                  %v1583 = vld [vmem:[%s1489 + $0x80] sm:$0xff]
                  %1584 = vst [vmem:[%s1490 + $0xa8] sm:$0xff] %v1583
                  %v1585 = vld [vmem:[%s1489 + $0x88] sm:$0xff]
                  %1586 = vst [vmem:[%s1490 + $0xb0] sm:$0xff] %v1585
                  %v1587 = vld [vmem:[%s1489 + $0x90] sm:$0xff]
                  %1588 = vst [vmem:[%s1490 + $0xb8] sm:$0xff] %v1587
                  %v1589 = vld [vmem:[%s1489 + $0x98] sm:$0xff]
                  %1590 = vst [vmem:[%s1490 + $0xc0] sm:$0xff] %v1589
                  %v1591 = vld [vmem:[%s1489 + $0xa0] sm:$0xff]
                  %1592 = vst [vmem:[%s1490 + $0xc8] sm:$0xff] %v1591
                  %v1593 = vld [vmem:[%s1489 + $0xa8] sm:$0xff]
                  %1594 = vst [vmem:[%s1490 + $0xd0] sm:$0xff] %v1593
                  %v1595 = vld [vmem:[%s1489 + $0xb0] sm:$0xff]
                  %1596 = vst [vmem:[%s1490 + $0xd8] sm:$0xff] %v1595
                  %v1597 = vld [vmem:[%s1489 + $0xb8] sm:$0xff]
                  %1598 = vst [vmem:[%s1490 + $0xe0] sm:$0xff] %v1597
                  %v1599 = vld [vmem:[%s1489 + $0xc0] sm:$0xff]
                  %1600 = vst [vmem:[%s1490 + $0xe8] sm:$0xff] %v1599
                  %v1601 = vld [vmem:[%s1489 + $0xc8] sm:$0xff]
                  %1602 = vst [vmem:[%s1490 + $0xf0] sm:$0xff] %v1601
                  %v1603 = vld [vmem:[%s1489 + $0xd0] sm:$0xff]
                  %1604 = vst [vmem:[%s1490 + $0xf8] sm:$0xff] %v1603
                  %v1605 = vld [vmem:[%s1489 + $0xd8] sm:$0xff]
                  %1606 = vst [vmem:[%s1490 + $0x100] sm:$0xff] %v1605
                  %v1607 = vld [vmem:[%s1489 + $0xe0] sm:$0xff]
                  %1608 = vst [vmem:[%s1490 + $0x108] sm:$0xff] %v1607
                  %v1609 = vld [vmem:[%s1489 + $0xe8] sm:$0xff]
                  %1610 = vst [vmem:[%s1490 + $0x110] sm:$0xff] %v1609
                  %v1611 = vld [vmem:[%s1489 + $0xf0] sm:$0xff]
                  %1612 = vst [vmem:[%s1490 + $0x118] sm:$0xff] %v1611
                  %v1613 = vld [vmem:[%s1489 + $0xf8] sm:$0xff]
                  %1614 = vst [vmem:[%s1490 + $0x120] sm:$0xff] %v1613
                  %v1615 = vld [vmem:[%s1489 + $0x100] sm:$0xff]
                  %1616 = vst [vmem:[%s1490 + $0x128] sm:$0xff] %v1615
                  %v1617 = vld [vmem:[%s1489 + $0x108] sm:$0xff]
                  %1618 = vst [vmem:[%s1490 + $0x130] sm:$0xff] %v1617
                  %s1619 = sadd.s32 1, %s1488
                  %p1620 = scmp.ge.s32.totalorder %s1619, %s1479
                  %s1621 = scalar_select %p1620, 0, %s1619
                  %s1622 = smul.u32 %s1621, 256
                  %s1623 = smul.u32 %s1621, 256
                  %s1624 = scalar_lea.vmem %s1248, %s1622 [#allocation3]
                  %s1625 = scalar_lea.vmem %s1261, %s1623
                $region152: #{tpu_custom_call.1} parent=146 // loop_footer
                  %s1485 = sadd.s32 %s1483, 1
                $region153: #{tpu_custom_call.1} parent=146 // loop_footer_branch
                  %1482 = sbr.rel target = $region149
                $region154: #{tpu_custom_call.1} parent=146 // loop_exit
                  _
                %s1626 = sshrl.u32 %s1478, 5
                %s1627 = sand.u32 %s1478, 31
                %s1628 = smul.u32 %s1626, 32
                %s1629 = smul.u32 128, %s1628
                %s1630 = sshra.s32 %s1629, 4
                %s1631 = scalar_lea.vmem %s1248, %s1630 [#allocation3]
                %s1632 = smul.u32 128, %s1628
                %s1633 = sshra.s32 %s1632, 4
                %s1634 = scalar_lea.vmem %s1261, %s1633
                // While loop
                $region155: #{tpu_custom_call.1} parent=146 // loop_pre_header
                  _
                $region156: #{tpu_custom_call.1} parent=146 // loop_header
                  %s1638 = sphi 0, %s1640
                  %p1639 = scmp.ge.s32.totalorder %s1638, %s1627
                  %s1643 = sphi 0, %s1652
                  %s1644 = sphi %s1631, %s1655
                  %s1645 = sphi %s1634, %s1656
                $region157: #{tpu_custom_call.1} parent=146 // loop_header_branch
                  %1642 = sbr.rel (%p1639) target = $region161
                $region158: #{tpu_custom_call.1} parent=146 // loop_body
                  %v1646 = vld [vmem:[%s1644] sm:$0xff]
                  %1647 = vst [vmem:[%s1645] sm:$0xff] %v1646
                  %v1648 = vld [vmem:[%s1644 + $0x10] sm:$0xff]
                  %1649 = vst [vmem:[%s1645 + $0x38] sm:$0xff] %v1648
                  %s1650 = sadd.s32 1, %s1643
                  %p1651 = scmp.ge.s32.totalorder %s1650, %s1627
                  %s1652 = scalar_select %p1651, 0, %s1650
                  %s1653 = smul.u32 %s1652, 8
                  %s1654 = smul.u32 %s1652, 8
                  %s1655 = scalar_lea.vmem %s1631, %s1653 [#allocation3]
                  %s1656 = scalar_lea.vmem %s1634, %s1654
                $region159: #{tpu_custom_call.1} parent=146 // loop_footer
                  %s1640 = sadd.s32 %s1638, 1
                $region160: #{tpu_custom_call.1} parent=146 // loop_footer_branch
                  %1637 = sbr.rel target = $region156
                $region161: #{tpu_custom_call.1} parent=146 // loop_exit
                  _
                %s1657 = sshllo.u32 0, %s1473
                loop: start=0, step=1, limit=1
                $region162: #{tpu_custom_call.1} parent=146 // loop_pre_header
                  _
                $region163: #{tpu_custom_call.1} parent=146 // loop_header
                  %s1659 = sphi 0, %s1663
                  %p1660 = scmp.ge.s32.totalorder %s1659, 1
                  %s1664 = sphi %s1475, %s1475
                  %s1665 = sphi %s1477, %s1477
                $region164: #{tpu_custom_call.1} parent=146 // loop_header_branch
                  %1662 = sbr.rel (%p1660) target = $region168
                $region165: #{tpu_custom_call.1} parent=146 // loop_body
                  %v1666 = vld [vmem:[%s1664] sm:%s1657]
                  %1667 = vst [vmem:[%s1665] sm:%s1657] %v1666
                  %v1668 = vld [vmem:[%s1664 + $0x10] sm:%s1657]
                  %1669 = vst [vmem:[%s1665 + $0x38] sm:%s1657] %v1668
                $region166: #{tpu_custom_call.1} parent=146 // loop_footer
                  %s1663 = sadd.s32 1, %s1659
                $region167: #{tpu_custom_call.1} parent=146 // loop_footer_branch
                  %1658 = sbr.rel target = $region163
                $region168: #{tpu_custom_call.1} parent=146 // loop_exit
                  _
              $region147: #{tpu_custom_call.1} parent=113 // pred_fallthru
                _
            $region114: #{tpu_custom_call.1} parent=109 // pred_fallthru
              _
            // Predicated region
            $region115: #{tpu_custom_call.1} parent=109 // pred_check
              %p1270 = pneg %p1266
            $region116: #{tpu_custom_call.1} parent=109 // pred_check_branch
              %1272 = sbr.rel (%p1270) target = $region118
            $region117: #{tpu_custom_call.1} parent=109 // pred_region
              %s1273 = sshllo.u32 0, %s1262
              loop: start=0, step=1, limit=1
              $region119: #{tpu_custom_call.1} parent=117 // loop_pre_header
                _
              $region120: #{tpu_custom_call.1} parent=117 // loop_header
                %s1275 = sphi 0, %s1279
                %p1276 = scmp.ge.s32.totalorder %s1275, 1
                %s1280 = sphi %s1248, %s1248
                %s1281 = sphi %s1261, %s1261
              $region121: #{tpu_custom_call.1} parent=117 // loop_header_branch
                %1278 = sbr.rel (%p1276) target = $region125
              $region122: #{tpu_custom_call.1} parent=117 // loop_body
                %v1282 = vld [vmem:[%s1280] sm:%s1273]
                %1283 = vst [vmem:[%s1281] sm:%s1273] %v1282
                %v1284 = vld [vmem:[%s1280 + $0x10] sm:%s1273]
                %1285 = vst [vmem:[%s1281 + $0x38] sm:%s1273] %v1284
              $region123: #{tpu_custom_call.1} parent=117 // loop_footer
                %s1279 = sadd.s32 1, %s1275
              $region124: #{tpu_custom_call.1} parent=117 // loop_footer_branch
                %1274 = sbr.rel target = $region120
              $region125: #{tpu_custom_call.1} parent=117 // loop_exit
                _
            $region118: #{tpu_custom_call.1} parent=109 // pred_fallthru
              _
          $region110: #{tpu_custom_call.1} parent=105 // pred_fallthru
            _
          %1670 = vnop
        $region106: #{tpu_custom_call.1} parent=97 // pred_fallthru
          _
      $region98: #{tpu_custom_call.1} parent=5 // pred_fallthru
        _
      %p1671 = scmp.le.s32.totalorder 2, %s10
      // Predicated region
      $region169: #{tpu_custom_call.1} parent=5 // pred_check
        %p1672 = pneg %p1671
      $region170: #{tpu_custom_call.1} parent=5 // pred_check_branch
        %1674 = sbr.rel (%p1672) target = $region172
      $region171: #{tpu_custom_call.1} parent=5 // pred_region
        %s1675 = ssub.s32 %s10, 2
        // Predicated region
        $region173: #{tpu_custom_call.1} parent=171 // pred_check
          %p1676 = pneg %p151
        $region174: #{tpu_custom_call.1} parent=171 // pred_check_branch
          %1678 = sbr.rel (%p1676) target = $region176
        $region175: #{tpu_custom_call.1} parent=171 // pred_region
          %s1679 = sand.u32 %s136, 1
          %s1680 = sand.u32 %s136, 1
          %s1681 = smul.addr %s1680, 32
          %s1682 = scalar_lea.vmem [#allocation3], %s1681
        $region176: #{tpu_custom_call.1} parent=171 // pred_fallthru
          _
      $region172: #{tpu_custom_call.1} parent=5 // pred_fallthru
        _
    $region6: #{tpu_custom_call.1} parent=1 // loop_footer
      %s14 = sadd.s32 1, %s10
    $region7: #{tpu_custom_call.1} parent=1 // loop_footer_branch
      %9 = sbr.rel target = $region3
    $region8: #{tpu_custom_call.1} parent=1 // loop_exit
      _

</llo_original>
